<compile_context>
chip_gen: v7x
topology: tpu7x:2x2x1
jax: 0.10.0
libtpu: 0.0.40
codegen_flags: <defaults>
</compile_context>

<pallas_src>
from functools import partial

import jax
import jax.numpy as jnp
from jax.experimental import pallas as pl
from jax.experimental.pallas import tpu as pltpu


def convlstm_cell_kernel(p_ref, w_ref, c_ref, h_out_ref, c_out_ref, *, HID):
    # p_ref    : (KPAD, N)    bf16  im2col patch; row (dh*KW+dw)*C + c, const-1 row at K0,
    #                               zero rows above; column = b*H*W + y*W + x
    # w_ref    : (4*HID, KPAD) bf16 conv weight (taps flattened to match patch rows),
    #                               bias folded into column K0, zero-padded above
    # c_ref    : (HID, N)     f32   current cell state
    # outputs  : (HID, N)     f32   h_next, c_next
    acc = jnp.dot(w_ref[...], p_ref[...], preferred_element_type=jnp.float32)

    # Gate order matches torch.split(combined_conv, hidden_dim, dim=1): i, f, o, g.
    # Each slice is a sublane-aligned (HID, N) window; consume in an order that
    # keeps f32 temporaries small.
    i = jax.nn.sigmoid(acc[0 * HID:1 * HID, :])
    g = jnp.tanh(acc[3 * HID:4 * HID, :])
    f = jax.nn.sigmoid(acc[1 * HID:2 * HID, :])
    c_next = f * c_ref[...] + i * g
    c_out_ref[...] = c_next
    o = jax.nn.sigmoid(acc[2 * HID:3 * HID, :])
    h_out_ref[...] = o * jnp.tanh(c_next)


@partial(jax.jit, static_argnames=("kernel_size",))
def conv_lstm_cell(x_nchw, h_nchw, c_nchw, weight, bias, kernel_size):
    """Pallas ConvLSTM cell. Inputs/outputs are NCHW f32 like the PyTorch module."""
    B, Cin, H, W = x_nchw.shape
    HID = h_nchw.shape[1]
    KH, KW = kernel_size
    ph, pw = KH // 2, KW // 2
    C = Cin + HID
    K0 = KH * KW * C                       # 324 for this config
    KPAD = ((K0 + 1 + 127) // 128) * 128   # 384: room for the bias row, 128-aligned
    M = H * W
    N = B * M                              # batch fused onto the lane axis

    # Channels-first with batch folded onto lanes: column index = b*M + y*W + x.
    comb = jnp.concatenate([x_nchw, h_nchw], axis=1)                    # (B, C, H, W)
    comb = jnp.transpose(comb, (1, 0, 2, 3)).astype(jnp.bfloat16)       # (C, B, H, W)
    comb_p = jnp.pad(comb, ((0, 0), (0, 0), (ph, ph), (pw, pw)))        # (C, B, Hp, Wp)

    # im2col: (KPAD, N); row index = (dh*KW + dw)*C + c, bias row of ones at K0.
    taps = [comb_p[:, :, dh:dh + H, dw:dw + W]
            for dh in range(KH) for dw in range(KW)]                    # each (C, B, H, W)
    patch = jnp.stack(taps, axis=0).reshape(K0, N)                      # (K0, N)
    patch = jnp.concatenate(
        [patch,
         jnp.ones((1, N), jnp.bfloat16),                                # bias row
         jnp.zeros((KPAD - K0 - 1, N), jnp.bfloat16)], axis=0)          # (KPAD, N)

    # PyTorch conv weight (4*HID, C, KH, KW) -> (4*HID, K0), col = (dh*KW+dw)*C + c,
    # then bias folded into column K0 and zero-padded to KPAD.
    w2d = jnp.transpose(weight, (0, 2, 3, 1)).reshape(4 * HID, K0)
    w2d = jnp.concatenate(
        [w2d, bias.reshape(4 * HID, 1),
         jnp.zeros((4 * HID, KPAD - K0 - 1), w2d.dtype)], axis=1).astype(jnp.bfloat16)

    c_in = jnp.transpose(c_nchw.reshape(B, HID, M), (1, 0, 2)).reshape(HID, N)
    c_in = c_in.astype(jnp.float32)

    kernel = partial(convlstm_cell_kernel, HID=HID)

    h_flat, c_flat = pl.pallas_call(
        kernel,
        out_shape=(jax.ShapeDtypeStruct((HID, N), jnp.float32),
                   jax.ShapeDtypeStruct((HID, N), jnp.float32)),
        grid=(1,),
        in_specs=[
            pl.BlockSpec((KPAD, N), lambda i: (0, 0)),        # im2col patch (+bias row)
            pl.BlockSpec((4 * HID, KPAD), lambda i: (0, 0)),  # weights (+bias column)
            pl.BlockSpec((HID, N), lambda i: (0, 0)),         # c_cur
        ],
        out_specs=(pl.BlockSpec((HID, N), lambda i: (0, 0)),
                   pl.BlockSpec((HID, N), lambda i: (0, 0))),
        input_output_aliases={2: 1},                          # c_in -> c_next in place
        compiler_params=pltpu.CompilerParams(
            dimension_semantics=("arbitrary",)),
    )(patch, w2d, c_in)

    # Small (HID, B, M) -> (B, HID, M) transposes back to NCHW.
    h_next = jnp.transpose(h_flat.reshape(HID, B, M), (1, 0, 2)).reshape(B, HID, H, W)
    c_next = jnp.transpose(c_flat.reshape(HID, B, M), (1, 0, 2)).reshape(B, HID, H, W)
    return h_next, c_next


def conv_lstm_cell_ref(x, h, c, weight, bias, kernel_size):
    """Pure-JAX reference matching the PyTorch forward (NCHW, f32)."""
    ph, pw = kernel_size[0] // 2, kernel_size[1] // 2
    comb = jnp.concatenate([x, h], axis=1)
    cc = jax.lax.conv_general_dilated(
        comb, weight, window_strides=(1, 1),
        padding=[(ph, ph), (pw, pw)],
        dimension_numbers=('NCHW', 'OIHW', 'NCHW'))
    cc = cc + bias[None, :, None, None]
    HID = h.shape[1]
    i = jax.nn.sigmoid(cc[:, 0 * HID:1 * HID])
    f = jax.nn.sigmoid(cc[:, 1 * HID:2 * HID])
    o = jax.nn.sigmoid(cc[:, 2 * HID:3 * HID])
    g = jnp.tanh(cc[:, 3 * HID:4 * HID])
    c_next = f * c + i * g
    h_next = o * jnp.tanh(c_next)
    return h_next, c_next


if __name__ == "__main__":
    # Module config: input_dim=4, hidden_dim=32, kernel_size=(3,3), bias=True
    B, CIN, HID, H, W = 2, 4, 32, 16, 16
    KH, KW = 3, 3

    key = jax.random.PRNGKey(0)
    kx, kh, kc, kw_, kb = jax.random.split(key, 5)

    x = jax.random.normal(kx, (B, CIN, H, W), dtype=jnp.float32)        # NCHW
    h_cur = jax.random.normal(kh, (B, HID, H, W), dtype=jnp.float32)
    c_cur = jax.random.normal(kc, (B, HID, H, W), dtype=jnp.float32)

    # Same shapes as nn.Conv2d(CIN+HID, 4*HID, (3,3), padding=1, bias=True)
    weight = 0.05 * jax.random.normal(kw_, (4 * HID, CIN + HID, KH, KW),
                                      dtype=jnp.float32)
    bias = 0.05 * jax.random.normal(kb, (4 * HID,), dtype=jnp.float32)

    h_next, c_next = conv_lstm_cell(x, h_cur, c_cur, weight, bias, (KH, KW))
    jax.block_until_ready((h_next, c_next))

    h_ref, c_ref = conv_lstm_cell_ref(x, h_cur, c_cur, weight, bias, (KH, KW))
    assert h_next.shape == (B, HID, H, W) and c_next.shape == (B, HID, H, W)
    # Tolerance accounts for bf16 MXU inputs (accumulation stays f32).
    assert jnp.allclose(h_next, h_ref, atol=5e-2, rtol=5e-2)
    assert jnp.allclose(c_next, c_ref, atol=5e-2, rtol=5e-2)

    print("KERNEL_OK")
</pallas_src>

<mosaic_0001>
module attributes {stable_mosaic.version = 11 : i64} {
  func.func @convlstm_cell_kernel(%arg0: i32, %arg1: memref<384x512xbf16, #tpu.memory_space<vmem>>, %arg2: memref<128x384xbf16, #tpu.memory_space<vmem>>, %arg3: memref<32x512xf32, #tpu.memory_space<vmem>>, %arg4: memref<32x512xf32, #tpu.memory_space<vmem>>, %arg5: memref<32x512xf32, #tpu.memory_space<vmem>>) attributes {dimension_semantics = [#tpu.dimension_semantics<arbitrary>], iteration_bounds = array<i64: 1>, scalar_prefetch = 0 : i64, scratch_operands = 0 : i64, tpu.core_type = #tpu.core_type<tc>, window_params = [{pipeline_mode = #tpu.pipeline_mode<synchronous>, transform_indices = @transform_0, window_bounds = array<i64: 384, 512>}, {pipeline_mode = #tpu.pipeline_mode<synchronous>, transform_indices = @transform_1, window_bounds = array<i64: 128, 384>}, {pipeline_mode = #tpu.pipeline_mode<synchronous>, transform_indices = @transform_2, window_bounds = array<i64: 32, 512>}, {pipeline_mode = #tpu.pipeline_mode<synchronous>, transform_indices = @transform_3, window_bounds = array<i64: 32, 512>}, {pipeline_mode = #tpu.pipeline_mode<synchronous>, transform_indices = @transform_4, window_bounds = array<i64: 32, 512>}]} {
    %c0 = arith.constant 0 : index
    %c0_0 = arith.constant 0 : index
    %0 = vector.load %arg2[%c0, %c0_0] : memref<128x384xbf16, #tpu.memory_space<vmem>>, vector<128x384xbf16>
    %c0_1 = arith.constant 0 : index
    %c0_2 = arith.constant 0 : index
    %1 = vector.load %arg1[%c0_1, %c0_2] : memref<384x512xbf16, #tpu.memory_space<vmem>>, vector<384x512xbf16>
    %cst = arith.constant dense<0.000000e+00> : vector<128x512xf32>
    %2 = tpu.matmul %0, %1, %cst {dimension_numbers = #tpu.dot_dimension_numbers<[1], [0], [0], [1], [0, 0, 1, 1], [], []>} : vector<128x384xbf16>, vector<384x512xbf16>, vector<128x512xf32> -> vector<128x512xf32>
    %3 = vector.extract_strided_slice %2 {offsets = [0, 0], sizes = [32, 512], strides = [1, 1]} : vector<128x512xf32> to vector<32x512xf32>
    %4 = arith.negf %3 : vector<32x512xf32>
    %5 = math.exp %4 : vector<32x512xf32>
    %cst_3 = arith.constant 1.000000e+00 : f32
    %6 = vector.broadcast %cst_3 : f32 to vector<32x512xf32>
    %7 = arith.addf %6, %5 : vector<32x512xf32>
    %8 = arith.divf %6, %7 : vector<32x512xf32>
    %9 = vector.extract_strided_slice %2 {offsets = [96, 0], sizes = [32, 512], strides = [1, 1]} : vector<128x512xf32> to vector<32x512xf32>
    %10 = math.tanh %9 : vector<32x512xf32>
    %11 = vector.extract_strided_slice %2 {offsets = [32, 0], sizes = [32, 512], strides = [1, 1]} : vector<128x512xf32> to vector<32x512xf32>
    %12 = arith.negf %11 : vector<32x512xf32>
    %13 = math.exp %12 : vector<32x512xf32>
    %cst_4 = arith.constant 1.000000e+00 : f32
    %14 = vector.broadcast %cst_4 : f32 to vector<32x512xf32>
    %15 = arith.addf %14, %13 : vector<32x512xf32>
    %16 = arith.divf %14, %15 : vector<32x512xf32>
    %c0_5 = arith.constant 0 : index
    %c0_6 = arith.constant 0 : index
    %17 = vector.load %arg3[%c0_5, %c0_6] : memref<32x512xf32, #tpu.memory_space<vmem>>, vector<32x512xf32>
    %18 = arith.mulf %16, %17 : vector<32x512xf32>
    %19 = arith.mulf %8, %10 : vector<32x512xf32>
    %20 = arith.addf %18, %19 : vector<32x512xf32>
    %c0_7 = arith.constant 0 : index
    %c0_8 = arith.constant 0 : index
    %21 = vector.load %arg5[%c0_7, %c0_8] : memref<32x512xf32, #tpu.memory_space<vmem>>, vector<32x512xf32>
    tpu.vector_store %arg5[%c0_7, %c0_8], %20 {strides = array<i32>} : memref<32x512xf32, #tpu.memory_space<vmem>>, vector<32x512xf32>,
    %22 = vector.extract_strided_slice %2 {offsets = [64, 0], sizes = [32, 512], strides = [1, 1]} : vector<128x512xf32> to vector<32x512xf32>
    %23 = arith.negf %22 : vector<32x512xf32>
    %24 = math.exp %23 : vector<32x512xf32>
    %cst_9 = arith.constant 1.000000e+00 : f32
    %25 = vector.broadcast %cst_9 : f32 to vector<32x512xf32>
    %26 = arith.addf %25, %24 : vector<32x512xf32>
    %27 = arith.divf %25, %26 : vector<32x512xf32>
    %28 = math.tanh %20 : vector<32x512xf32>
    %29 = arith.mulf %27, %28 : vector<32x512xf32>
    %c0_10 = arith.constant 0 : index
    %c0_11 = arith.constant 0 : index
    %30 = vector.load %arg4[%c0_10, %c0_11] : memref<32x512xf32, #tpu.memory_space<vmem>>, vector<32x512xf32>
    tpu.vector_store %arg4[%c0_10, %c0_11], %29 {strides = array<i32>} : memref<32x512xf32, #tpu.memory_space<vmem>>, vector<32x512xf32>,
    return
  }
  func.func @transform_0(%arg0: i32) -> (i32, i32) {
    %c0_i32 = arith.constant 0 : i32
    %c0_i32_0 = arith.constant 0 : i32
    %c0_i32_1 = arith.constant 0 : i32
    return %c0_i32, %c0_i32_0 : i32, i32
  }
  func.func @transform_1(%arg0: i32) -> (i32, i32) {
    %c0_i32 = arith.constant 0 : i32
    %c0_i32_0 = arith.constant 0 : i32
    %c0_i32_1 = arith.constant 0 : i32
    return %c0_i32, %c0_i32_0 : i32, i32
  }
  func.func @transform_2(%arg0: i32) -> (i32, i32) {
    %c0_i32 = arith.constant 0 : i32
    %c0_i32_0 = arith.constant 0 : i32
    %c0_i32_1 = arith.constant 0 : i32
    return %c0_i32, %c0_i32_0 : i32, i32
  }
  func.func @transform_3(%arg0: i32) -> (i32, i32) {
    %c0_i32 = arith.constant 0 : i32
    %c0_i32_0 = arith.constant 0 : i32
    %c0_i32_1 = arith.constant 0 : i32
    return %c0_i32, %c0_i32_0 : i32, i32
  }
  func.func @transform_4(%arg0: i32) -> (i32, i32) {
    %c0_i32 = arith.constant 0 : i32
    %c0_i32_0 = arith.constant 0 : i32
    %c0_i32_1 = arith.constant 0 : i32
    return %c0_i32, %c0_i32_0 : i32, i32
  }
}

</mosaic_0001>

<llo_original>
// kernel: conv_lstm_cell.1
$region0: #{conv_lstm_cell.1}
  #allocation0 [shape = 'u32[]', space=smem, size = 0x4, offset = 0x4, fixed_abs, tag = 'smem constant byte address 0x4 - core index']
  #allocation1 [shape = 'u32[144,128]{1,0:T(1,128)}', space=vmem, size = 0x12000, scoped, tag = 'internal scratch']
  %s0 = inlined_call_operand.vmem [shape: bf16[384,512], index: 0, kind: input, shape index: {}]
  %s1 = inlined_call_operand.vmem [shape: bf16[128,384], index: 1, kind: input, shape index: {}]
  %s2 = inlined_call_operand.vmem [shape: f32[32,512], index: 2, kind: input, shape index: {}, may-alias: {2,4}]
  %s3 = inlined_call_operand.vmem [shape: f32[32,512], index: 3, kind: output, shape index: {0}]
  %s4 = inlined_call_operand.vmem [shape: f32[32,512], index: 4, kind: output, shape index: {1}, may-alias: {2,4}]
  %5 = xla_tuple %s3, %s4
  %s6 = sld [smem:[#allocation0]]
  $region30: #{conv_lstm_cell.1} parent=0
    _
  %s8 = ssub.s32 1, %s6
  %s9 = scalar_select 0, %s8, %s6
  // Predicated region
  $region2: #{conv_lstm_cell.1} parent=0 // pred_check
    _
  $region3: #{conv_lstm_cell.1} parent=0 // pred_check_branch
    %11 = sbr.rel (0) target = $region5
  $region4: #{conv_lstm_cell.1} parent=0 // pred_region
    _
  $region5: #{conv_lstm_cell.1} parent=0 // pred_fallthru
    _
  // Predicated region
  $region6: #{conv_lstm_cell.1} parent=0 // pred_check
    _
  $region7: #{conv_lstm_cell.1} parent=0 // pred_check_branch
    %13 = sbr.rel (0) target = $region9
  $region8: #{conv_lstm_cell.1} parent=0 // pred_region
    _
  $region9: #{conv_lstm_cell.1} parent=0 // pred_fallthru
    _
  // Predicated region
  $region10: #{conv_lstm_cell.1} parent=0 // pred_check
    _
  $region11: #{conv_lstm_cell.1} parent=0 // pred_check_branch
    %15 = sbr.rel (0) target = $region13
  $region12: #{conv_lstm_cell.1} parent=0 // pred_region
    _
  $region13: #{conv_lstm_cell.1} parent=0 // pred_fallthru
    _
  %v17 = vld [vmem:[%s1] sm:$0xff]
  %v18 = vld [vmem:[%s1 + $0x8] sm:$0xf]
  %v19 = vld [vmem:[%s1 + $0xc] sm:$0xff]
  %v20 = vld [vmem:[%s1 + $0x14] sm:$0xf]
  %v21 = vld [vmem:[%s1 + $0x18] sm:$0xff]
  %v22 = vld [vmem:[%s1 + $0x20] sm:$0xf]
  %v23 = vld [vmem:[%s1 + $0x24] sm:$0xff]
  %v24 = vld [vmem:[%s1 + $0x2c] sm:$0xf]
  %v25 = vld [vmem:[%s1 + $0x30] sm:$0xff]
  %v26 = vld [vmem:[%s1 + $0x38] sm:$0xf]
  %v27 = vld [vmem:[%s1 + $0x3c] sm:$0xff]
  %v28 = vld [vmem:[%s1 + $0x44] sm:$0xf]
  %v29 = vld [vmem:[%s1 + $0x48] sm:$0xff]
  %v30 = vld [vmem:[%s1 + $0x50] sm:$0xf]
  %v31 = vld [vmem:[%s1 + $0x54] sm:$0xff]
  %v32 = vld [vmem:[%s1 + $0x5c] sm:$0xf]
  %v33 = vld [vmem:[%s1 + $0x60] sm:$0xff]
  %v34 = vld [vmem:[%s1 + $0x68] sm:$0xf]
  %v35 = vld [vmem:[%s1 + $0x6c] sm:$0xff]
  %v36 = vld [vmem:[%s1 + $0x74] sm:$0xf]
  %v37 = vld [vmem:[%s1 + $0x78] sm:$0xff]
  %v38 = vld [vmem:[%s1 + $0x80] sm:$0xf]
  %v39 = vld [vmem:[%s1 + $0x84] sm:$0xff]
  %v40 = vld [vmem:[%s1 + $0x8c] sm:$0xf]
  %v41 = vld [vmem:[%s1 + $0x90] sm:$0xff]
  %v42 = vld [vmem:[%s1 + $0x98] sm:$0xf]
  %v43 = vld [vmem:[%s1 + $0x9c] sm:$0xff]
  %v44 = vld [vmem:[%s1 + $0xa4] sm:$0xf]
  %v45 = vld [vmem:[%s1 + $0xa8] sm:$0xff]
  %v46 = vld [vmem:[%s1 + $0xb0] sm:$0xf]
  %v47 = vld [vmem:[%s1 + $0xb4] sm:$0xff]
  %v48 = vld [vmem:[%s1 + $0xbc] sm:$0xf]
  %v49 = vld [vmem:[%s0] sm:$0xff]
  %v50 = vld [vmem:[%s0 + $0x8] sm:$0xff]
  %v51 = vld [vmem:[%s0 + $0x10] sm:$0xff]
  %v52 = vld [vmem:[%s0 + $0x18] sm:$0xff]
  %v53 = vld [vmem:[%s0 + $0x20] sm:$0xff]
  %v54 = vld [vmem:[%s0 + $0x28] sm:$0xff]
  %v55 = vld [vmem:[%s0 + $0x30] sm:$0xff]
  %v56 = vld [vmem:[%s0 + $0x38] sm:$0xff]
  %v57 = vld [vmem:[%s0 + $0x40] sm:$0xff]
  %v58 = vld [vmem:[%s0 + $0x48] sm:$0xff]
  %v59 = vld [vmem:[%s0 + $0x50] sm:$0xff]
  %v60 = vld [vmem:[%s0 + $0x58] sm:$0xff]
  %v61 = vld [vmem:[%s0 + $0x60] sm:$0xff]
  %v62 = vld [vmem:[%s0 + $0x68] sm:$0xff]
  %v63 = vld [vmem:[%s0 + $0x70] sm:$0xff]
  %v64 = vld [vmem:[%s0 + $0x78] sm:$0xff]
  %v65 = vld [vmem:[%s0 + $0x80] sm:$0xff]
  %v66 = vld [vmem:[%s0 + $0x88] sm:$0xff]
  %v67 = vld [vmem:[%s0 + $0x90] sm:$0xff]
  %v68 = vld [vmem:[%s0 + $0x98] sm:$0xff]
  %v69 = vld [vmem:[%s0 + $0xa0] sm:$0xff]
  %v70 = vld [vmem:[%s0 + $0xa8] sm:$0xff]
  %v71 = vld [vmem:[%s0 + $0xb0] sm:$0xff]
  %v72 = vld [vmem:[%s0 + $0xb8] sm:$0xff]
  %v73 = vld [vmem:[%s0 + $0xc0] sm:$0xff]
  %v74 = vld [vmem:[%s0 + $0xc8] sm:$0xff]
  %v75 = vld [vmem:[%s0 + $0xd0] sm:$0xff]
  %v76 = vld [vmem:[%s0 + $0xd8] sm:$0xff]
  %v77 = vld [vmem:[%s0 + $0xe0] sm:$0xff]
  %v78 = vld [vmem:[%s0 + $0xe8] sm:$0xff]
  %v79 = vld [vmem:[%s0 + $0xf0] sm:$0xff]
  %v80 = vld [vmem:[%s0 + $0xf8] sm:$0xff]
  %v81 = vld [vmem:[%s0 + $0x100] sm:$0xff]
  %v82 = vld [vmem:[%s0 + $0x108] sm:$0xff]
  %v83 = vld [vmem:[%s0 + $0x110] sm:$0xff]
  %v84 = vld [vmem:[%s0 + $0x118] sm:$0xff]
  %v85 = vld [vmem:[%s0 + $0x120] sm:$0xff]
  %v86 = vld [vmem:[%s0 + $0x128] sm:$0xff]
  %v87 = vld [vmem:[%s0 + $0x130] sm:$0xff]
  %v88 = vld [vmem:[%s0 + $0x138] sm:$0xff]
  %v89 = vld [vmem:[%s0 + $0x140] sm:$0xff]
  %v90 = vld [vmem:[%s0 + $0x148] sm:$0xff]
  %v91 = vld [vmem:[%s0 + $0x150] sm:$0xff]
  %v92 = vld [vmem:[%s0 + $0x158] sm:$0xff]
  %v93 = vld [vmem:[%s0 + $0x160] sm:$0xff]
  %v94 = vld [vmem:[%s0 + $0x168] sm:$0xff]
  %v95 = vld [vmem:[%s0 + $0x170] sm:$0xff]
  %v96 = vld [vmem:[%s0 + $0x178] sm:$0xff]
  %v97 = vld [vmem:[%s0 + $0x180] sm:$0xff]
  %v98 = vld [vmem:[%s0 + $0x188] sm:$0xff]
  %v99 = vld [vmem:[%s0 + $0x190] sm:$0xff]
  %v100 = vld [vmem:[%s0 + $0x198] sm:$0xff]
  %v101 = vld [vmem:[%s0 + $0x1a0] sm:$0xff]
  %v102 = vld [vmem:[%s0 + $0x1a8] sm:$0xff]
  %v103 = vld [vmem:[%s0 + $0x1b0] sm:$0xff]
  %v104 = vld [vmem:[%s0 + $0x1b8] sm:$0xff]
  %v105 = vld [vmem:[%s0 + $0x1c0] sm:$0xff]
  %v106 = vld [vmem:[%s0 + $0x1c8] sm:$0xff]
  %v107 = vld [vmem:[%s0 + $0x1d0] sm:$0xff]
  %v108 = vld [vmem:[%s0 + $0x1d8] sm:$0xff]
  %v109 = vld [vmem:[%s0 + $0x1e0] sm:$0xff]
  %v110 = vld [vmem:[%s0 + $0x1e8] sm:$0xff]
  %v111 = vld [vmem:[%s0 + $0x1f0] sm:$0xff]
  %v112 = vld [vmem:[%s0 + $0x1f8] sm:$0xff]
  %v113 = vld [vmem:[%s0 + $0x200] sm:$0xff]
  %v114 = vld [vmem:[%s0 + $0x208] sm:$0xff]
  %v115 = vld [vmem:[%s0 + $0x210] sm:$0xff]
  %v116 = vld [vmem:[%s0 + $0x218] sm:$0xff]
  %v117 = vld [vmem:[%s0 + $0x220] sm:$0xff]
  %v118 = vld [vmem:[%s0 + $0x228] sm:$0xff]
  %v119 = vld [vmem:[%s0 + $0x230] sm:$0xff]
  %v120 = vld [vmem:[%s0 + $0x238] sm:$0xff]
  %v121 = vld [vmem:[%s0 + $0x240] sm:$0xff]
  %v122 = vld [vmem:[%s0 + $0x248] sm:$0xff]
  %v123 = vld [vmem:[%s0 + $0x250] sm:$0xff]
  %v124 = vld [vmem:[%s0 + $0x258] sm:$0xff]
  %v125 = vld [vmem:[%s0 + $0x260] sm:$0xff]
  %v126 = vld [vmem:[%s0 + $0x268] sm:$0xff]
  %v127 = vld [vmem:[%s0 + $0x270] sm:$0xff]
  %v128 = vld [vmem:[%s0 + $0x278] sm:$0xff]
  %v129 = vld [vmem:[%s0 + $0x280] sm:$0xff]
  %v130 = vld [vmem:[%s0 + $0x288] sm:$0xff]
  %v131 = vld [vmem:[%s0 + $0x290] sm:$0xff]
  %v132 = vld [vmem:[%s0 + $0x298] sm:$0xff]
  %v133 = vld [vmem:[%s0 + $0x2a0] sm:$0xff]
  %v134 = vld [vmem:[%s0 + $0x2a8] sm:$0xff]
  %v135 = vld [vmem:[%s0 + $0x2b0] sm:$0xff]
  %v136 = vld [vmem:[%s0 + $0x2b8] sm:$0xff]
  %v137 = vld [vmem:[%s0 + $0x2c0] sm:$0xff]
  %v138 = vld [vmem:[%s0 + $0x2c8] sm:$0xff]
  %v139 = vld [vmem:[%s0 + $0x2d0] sm:$0xff]
  %v140 = vld [vmem:[%s0 + $0x2d8] sm:$0xff]
  %v141 = vld [vmem:[%s0 + $0x2e0] sm:$0xff]
  %v142 = vld [vmem:[%s0 + $0x2e8] sm:$0xff]
  %v143 = vld [vmem:[%s0 + $0x2f0] sm:$0xff]
  %v144 = vld [vmem:[%s0 + $0x2f8] sm:$0xff]
  %v177 = vunpack.c.l.b16 %v17
  %v178 = vunpack.c.h.b16 %v17
  %v179 = vunpack.c.l.b16 %v18
  %v180 = vunpack.c.l.b16 %v19
  %v181 = vunpack.c.h.b16 %v19
  %v182 = vunpack.c.l.b16 %v20
  %v183 = vunpack.c.l.b16 %v21
  %v184 = vunpack.c.h.b16 %v21
  %v185 = vunpack.c.l.b16 %v22
  %v186 = vunpack.c.l.b16 %v23
  %v187 = vunpack.c.h.b16 %v23
  %v188 = vunpack.c.l.b16 %v24
  %v189 = vunpack.c.l.b16 %v25
  %v190 = vunpack.c.h.b16 %v25
  %v191 = vunpack.c.l.b16 %v26
  %v192 = vunpack.c.l.b16 %v27
  %v193 = vunpack.c.h.b16 %v27
  %v194 = vunpack.c.l.b16 %v28
  %v195 = vunpack.c.l.b16 %v29
  %v196 = vunpack.c.h.b16 %v29
  %v197 = vunpack.c.l.b16 %v30
  %v198 = vunpack.c.l.b16 %v31
  %v199 = vunpack.c.h.b16 %v31
  %v200 = vunpack.c.l.b16 %v32
  %v201 = vunpack.c.l.b16 %v33
  %v202 = vunpack.c.h.b16 %v33
  %v203 = vunpack.c.l.b16 %v34
  %v204 = vunpack.c.l.b16 %v35
  %v205 = vunpack.c.h.b16 %v35
  %v206 = vunpack.c.l.b16 %v36
  %v207 = vunpack.c.l.b16 %v37
  %v208 = vunpack.c.h.b16 %v37
  %v209 = vunpack.c.l.b16 %v38
  %v210 = vunpack.c.l.b16 %v39
  %v211 = vunpack.c.h.b16 %v39
  %v212 = vunpack.c.l.b16 %v40
  %v213 = vunpack.c.l.b16 %v41
  %v214 = vunpack.c.h.b16 %v41
  %v215 = vunpack.c.l.b16 %v42
  %v216 = vunpack.c.l.b16 %v43
  %v217 = vunpack.c.h.b16 %v43
  %v218 = vunpack.c.l.b16 %v44
  %v219 = vunpack.c.l.b16 %v45
  %v220 = vunpack.c.h.b16 %v45
  %v221 = vunpack.c.l.b16 %v46
  %v222 = vunpack.c.l.b16 %v47
  %v223 = vunpack.c.h.b16 %v47
  %v224 = vunpack.c.l.b16 %v48
  %v225 = vpack.c.b16 %v180, %v177
  %v226 = vpack.c.b16 %v181, %v178
  %v227 = vpack.c.b16 %v182, %v179
  %v228 = vpack.c.b16 %v186, %v183
  %v229 = vpack.c.b16 %v187, %v184
  %v230 = vpack.c.b16 %v188, %v185
  %v231 = vpack.c.b16 %v192, %v189
  %v232 = vpack.c.b16 %v193, %v190
  %v233 = vpack.c.b16 %v194, %v191
  %v234 = vpack.c.b16 %v198, %v195
  %v235 = vpack.c.b16 %v199, %v196
  %v236 = vpack.c.b16 %v200, %v197
  %v237 = vpack.c.b16 %v204, %v201
  %v238 = vpack.c.b16 %v205, %v202
  %v239 = vpack.c.b16 %v206, %v203
  %v240 = vpack.c.b16 %v210, %v207
  %v241 = vpack.c.b16 %v211, %v208
  %v242 = vpack.c.b16 %v212, %v209
  %v243 = vpack.c.b16 %v216, %v213
  %v244 = vpack.c.b16 %v217, %v214
  %v245 = vpack.c.b16 %v218, %v215
  %v246 = vpack.c.b16 %v222, %v219
  %v247 = vpack.c.b16 %v223, %v220
  %v248 = vpack.c.b16 %v224, %v221
  %v369 = vunpack.c.l.b16 %v49
  %v370 = vunpack.c.h.b16 %v49
  %v371 = vunpack.c.l.b16 %v50
  %v372 = vunpack.c.h.b16 %v50
  %v373 = vunpack.c.l.b16 %v51
  %v374 = vunpack.c.h.b16 %v51
  %v375 = vunpack.c.l.b16 %v52
  %v376 = vunpack.c.h.b16 %v52
  %v377 = vunpack.c.l.b16 %v53
  %v378 = vunpack.c.h.b16 %v53
  %v379 = vunpack.c.l.b16 %v54
  %v380 = vunpack.c.h.b16 %v54
  %v381 = vunpack.c.l.b16 %v55
  %v382 = vunpack.c.h.b16 %v55
  %v383 = vunpack.c.l.b16 %v56
  %v384 = vunpack.c.h.b16 %v56
  %v385 = vunpack.c.l.b16 %v57
  %v386 = vunpack.c.h.b16 %v57
  %v387 = vunpack.c.l.b16 %v58
  %v388 = vunpack.c.h.b16 %v58
  %v389 = vunpack.c.l.b16 %v59
  %v390 = vunpack.c.h.b16 %v59
  %v391 = vunpack.c.l.b16 %v60
  %v392 = vunpack.c.h.b16 %v60
  %v393 = vunpack.c.l.b16 %v61
  %v394 = vunpack.c.h.b16 %v61
  %v395 = vunpack.c.l.b16 %v62
  %v396 = vunpack.c.h.b16 %v62
  %v397 = vunpack.c.l.b16 %v63
  %v398 = vunpack.c.h.b16 %v63
  %v399 = vunpack.c.l.b16 %v64
  %v400 = vunpack.c.h.b16 %v64
  %v401 = vunpack.c.l.b16 %v65
  %v402 = vunpack.c.h.b16 %v65
  %v403 = vunpack.c.l.b16 %v66
  %v404 = vunpack.c.h.b16 %v66
  %v405 = vunpack.c.l.b16 %v67
  %v406 = vunpack.c.h.b16 %v67
  %v407 = vunpack.c.l.b16 %v68
  %v408 = vunpack.c.h.b16 %v68
  %v409 = vunpack.c.l.b16 %v69
  %v410 = vunpack.c.h.b16 %v69
  %v411 = vunpack.c.l.b16 %v70
  %v412 = vunpack.c.h.b16 %v70
  %v413 = vunpack.c.l.b16 %v71
  %v414 = vunpack.c.h.b16 %v71
  %v415 = vunpack.c.l.b16 %v72
  %v416 = vunpack.c.h.b16 %v72
  %v417 = vunpack.c.l.b16 %v73
  %v418 = vunpack.c.h.b16 %v73
  %v419 = vunpack.c.l.b16 %v74
  %v420 = vunpack.c.h.b16 %v74
  %v421 = vunpack.c.l.b16 %v75
  %v422 = vunpack.c.h.b16 %v75
  %v423 = vunpack.c.l.b16 %v76
  %v424 = vunpack.c.h.b16 %v76
  %v425 = vunpack.c.l.b16 %v77
  %v426 = vunpack.c.h.b16 %v77
  %v427 = vunpack.c.l.b16 %v78
  %v428 = vunpack.c.h.b16 %v78
  %v429 = vunpack.c.l.b16 %v79
  %v430 = vunpack.c.h.b16 %v79
  %v431 = vunpack.c.l.b16 %v80
  %v432 = vunpack.c.h.b16 %v80
  %v433 = vunpack.c.l.b16 %v81
  %v434 = vunpack.c.h.b16 %v81
  %v435 = vunpack.c.l.b16 %v82
  %v436 = vunpack.c.h.b16 %v82
  %v437 = vunpack.c.l.b16 %v83
  %v438 = vunpack.c.h.b16 %v83
  %v439 = vunpack.c.l.b16 %v84
  %v440 = vunpack.c.h.b16 %v84
  %v441 = vunpack.c.l.b16 %v85
  %v442 = vunpack.c.h.b16 %v85
  %v443 = vunpack.c.l.b16 %v86
  %v444 = vunpack.c.h.b16 %v86
  %v445 = vunpack.c.l.b16 %v87
  %v446 = vunpack.c.h.b16 %v87
  %v447 = vunpack.c.l.b16 %v88
  %v448 = vunpack.c.h.b16 %v88
  %v449 = vunpack.c.l.b16 %v89
  %v450 = vunpack.c.h.b16 %v89
  %v451 = vunpack.c.l.b16 %v90
  %v452 = vunpack.c.h.b16 %v90
  %v453 = vunpack.c.l.b16 %v91
  %v454 = vunpack.c.h.b16 %v91
  %v455 = vunpack.c.l.b16 %v92
  %v456 = vunpack.c.h.b16 %v92
  %v457 = vunpack.c.l.b16 %v93
  %v458 = vunpack.c.h.b16 %v93
  %v459 = vunpack.c.l.b16 %v94
  %v460 = vunpack.c.h.b16 %v94
  %v461 = vunpack.c.l.b16 %v95
  %v462 = vunpack.c.h.b16 %v95
  %v463 = vunpack.c.l.b16 %v96
  %v464 = vunpack.c.h.b16 %v96
  %v465 = vunpack.c.l.b16 %v97
  %v466 = vunpack.c.h.b16 %v97
  %v467 = vunpack.c.l.b16 %v98
  %v468 = vunpack.c.h.b16 %v98
  %v469 = vunpack.c.l.b16 %v99
  %v470 = vunpack.c.h.b16 %v99
  %v471 = vunpack.c.l.b16 %v100
  %v472 = vunpack.c.h.b16 %v100
  %v473 = vunpack.c.l.b16 %v101
  %v474 = vunpack.c.h.b16 %v101
  %v475 = vunpack.c.l.b16 %v102
  %v476 = vunpack.c.h.b16 %v102
  %v477 = vunpack.c.l.b16 %v103
  %v478 = vunpack.c.h.b16 %v103
  %v479 = vunpack.c.l.b16 %v104
  %v480 = vunpack.c.h.b16 %v104
  %v481 = vunpack.c.l.b16 %v105
  %v482 = vunpack.c.h.b16 %v105
  %v483 = vunpack.c.l.b16 %v106
  %v484 = vunpack.c.h.b16 %v106
  %v485 = vunpack.c.l.b16 %v107
  %v486 = vunpack.c.h.b16 %v107
  %v487 = vunpack.c.l.b16 %v108
  %v488 = vunpack.c.h.b16 %v108
  %v489 = vunpack.c.l.b16 %v109
  %v490 = vunpack.c.h.b16 %v109
  %v491 = vunpack.c.l.b16 %v110
  %v492 = vunpack.c.h.b16 %v110
  %v493 = vunpack.c.l.b16 %v111
  %v494 = vunpack.c.h.b16 %v111
  %v495 = vunpack.c.l.b16 %v112
  %v496 = vunpack.c.h.b16 %v112
  %v497 = vunpack.c.l.b16 %v113
  %v498 = vunpack.c.h.b16 %v113
  %v499 = vunpack.c.l.b16 %v114
  %v500 = vunpack.c.h.b16 %v114
  %v501 = vunpack.c.l.b16 %v115
  %v502 = vunpack.c.h.b16 %v115
  %v503 = vunpack.c.l.b16 %v116
  %v504 = vunpack.c.h.b16 %v116
  %v505 = vunpack.c.l.b16 %v117
  %v506 = vunpack.c.h.b16 %v117
  %v507 = vunpack.c.l.b16 %v118
  %v508 = vunpack.c.h.b16 %v118
  %v509 = vunpack.c.l.b16 %v119
  %v510 = vunpack.c.h.b16 %v119
  %v511 = vunpack.c.l.b16 %v120
  %v512 = vunpack.c.h.b16 %v120
  %v513 = vunpack.c.l.b16 %v121
  %v514 = vunpack.c.h.b16 %v121
  %v515 = vunpack.c.l.b16 %v122
  %v516 = vunpack.c.h.b16 %v122
  %v517 = vunpack.c.l.b16 %v123
  %v518 = vunpack.c.h.b16 %v123
  %v519 = vunpack.c.l.b16 %v124
  %v520 = vunpack.c.h.b16 %v124
  %v521 = vunpack.c.l.b16 %v125
  %v522 = vunpack.c.h.b16 %v125
  %v523 = vunpack.c.l.b16 %v126
  %v524 = vunpack.c.h.b16 %v126
  %v525 = vunpack.c.l.b16 %v127
  %v526 = vunpack.c.h.b16 %v127
  %v527 = vunpack.c.l.b16 %v128
  %v528 = vunpack.c.h.b16 %v128
  %v529 = vunpack.c.l.b16 %v129
  %v530 = vunpack.c.h.b16 %v129
  %v531 = vunpack.c.l.b16 %v130
  %v532 = vunpack.c.h.b16 %v130
  %v533 = vunpack.c.l.b16 %v131
  %v534 = vunpack.c.h.b16 %v131
  %v535 = vunpack.c.l.b16 %v132
  %v536 = vunpack.c.h.b16 %v132
  %v537 = vunpack.c.l.b16 %v133
  %v538 = vunpack.c.h.b16 %v133
  %v539 = vunpack.c.l.b16 %v134
  %v540 = vunpack.c.h.b16 %v134
  %v541 = vunpack.c.l.b16 %v135
  %v542 = vunpack.c.h.b16 %v135
  %v543 = vunpack.c.l.b16 %v136
  %v544 = vunpack.c.h.b16 %v136
  %v545 = vunpack.c.l.b16 %v137
  %v546 = vunpack.c.h.b16 %v137
  %v547 = vunpack.c.l.b16 %v138
  %v548 = vunpack.c.h.b16 %v138
  %v549 = vunpack.c.l.b16 %v139
  %v550 = vunpack.c.h.b16 %v139
  %v551 = vunpack.c.l.b16 %v140
  %v552 = vunpack.c.h.b16 %v140
  %v553 = vunpack.c.l.b16 %v141
  %v554 = vunpack.c.h.b16 %v141
  %v555 = vunpack.c.l.b16 %v142
  %v556 = vunpack.c.h.b16 %v142
  %v557 = vunpack.c.l.b16 %v143
  %v558 = vunpack.c.h.b16 %v143
  %v559 = vunpack.c.l.b16 %v144
  %v560 = vunpack.c.h.b16 %v144
  %v561 = vpack.c.b16 %v373, %v369
  %v562 = vpack.c.b16 %v374, %v370
  %v563 = vpack.c.b16 %v375, %v371
  %v564 = vpack.c.b16 %v376, %v372
  %v565 = vpack.c.b16 %v381, %v377
  %v566 = vpack.c.b16 %v382, %v378
  %v567 = vpack.c.b16 %v383, %v379
  %v568 = vpack.c.b16 %v384, %v380
  %v569 = vpack.c.b16 %v389, %v385
  %v570 = vpack.c.b16 %v390, %v386
  %v571 = vpack.c.b16 %v391, %v387
  %v572 = vpack.c.b16 %v392, %v388
  %v573 = vpack.c.b16 %v397, %v393
  %v574 = vpack.c.b16 %v398, %v394
  %v575 = vpack.c.b16 %v399, %v395
  %v576 = vpack.c.b16 %v400, %v396
  %v577 = vpack.c.b16 %v405, %v401
  %v578 = vpack.c.b16 %v406, %v402
  %v579 = vpack.c.b16 %v407, %v403
  %v580 = vpack.c.b16 %v408, %v404
  %v581 = vpack.c.b16 %v413, %v409
  %v582 = vpack.c.b16 %v414, %v410
  %v583 = vpack.c.b16 %v415, %v411
  %v584 = vpack.c.b16 %v416, %v412
  %v585 = vpack.c.b16 %v421, %v417
  %v586 = vpack.c.b16 %v422, %v418
  %v587 = vpack.c.b16 %v423, %v419
  %v588 = vpack.c.b16 %v424, %v420
  %v589 = vpack.c.b16 %v429, %v425
  %v590 = vpack.c.b16 %v430, %v426
  %v591 = vpack.c.b16 %v431, %v427
  %v592 = vpack.c.b16 %v432, %v428
  %v593 = vpack.c.b16 %v437, %v433
  %v594 = vpack.c.b16 %v438, %v434
  %v595 = vpack.c.b16 %v439, %v435
  %v596 = vpack.c.b16 %v440, %v436
  %v597 = vpack.c.b16 %v445, %v441
  %v598 = vpack.c.b16 %v446, %v442
  %v599 = vpack.c.b16 %v447, %v443
  %v600 = vpack.c.b16 %v448, %v444
  %v601 = vpack.c.b16 %v453, %v449
  %v602 = vpack.c.b16 %v454, %v450
  %v603 = vpack.c.b16 %v455, %v451
  %v604 = vpack.c.b16 %v456, %v452
  %v605 = vpack.c.b16 %v461, %v457
  %v606 = vpack.c.b16 %v462, %v458
  %v607 = vpack.c.b16 %v463, %v459
  %v608 = vpack.c.b16 %v464, %v460
  %v609 = vpack.c.b16 %v469, %v465
  %v610 = vpack.c.b16 %v470, %v466
  %v611 = vpack.c.b16 %v471, %v467
  %v612 = vpack.c.b16 %v472, %v468
  %v613 = vpack.c.b16 %v477, %v473
  %v614 = vpack.c.b16 %v478, %v474
  %v615 = vpack.c.b16 %v479, %v475
  %v616 = vpack.c.b16 %v480, %v476
  %v617 = vpack.c.b16 %v485, %v481
  %v618 = vpack.c.b16 %v486, %v482
  %v619 = vpack.c.b16 %v487, %v483
  %v620 = vpack.c.b16 %v488, %v484
  %v621 = vpack.c.b16 %v493, %v489
  %v622 = vpack.c.b16 %v494, %v490
  %v623 = vpack.c.b16 %v495, %v491
  %v624 = vpack.c.b16 %v496, %v492
  %v625 = vpack.c.b16 %v501, %v497
  %v626 = vpack.c.b16 %v502, %v498
  %v627 = vpack.c.b16 %v503, %v499
  %v628 = vpack.c.b16 %v504, %v500
  %v629 = vpack.c.b16 %v509, %v505
  %v630 = vpack.c.b16 %v510, %v506
  %v631 = vpack.c.b16 %v511, %v507
  %v632 = vpack.c.b16 %v512, %v508
  %v633 = vpack.c.b16 %v517, %v513
  %v634 = vpack.c.b16 %v518, %v514
  %v635 = vpack.c.b16 %v519, %v515
  %v636 = vpack.c.b16 %v520, %v516
  %v637 = vpack.c.b16 %v525, %v521
  %v638 = vpack.c.b16 %v526, %v522
  %v639 = vpack.c.b16 %v527, %v523
  %v640 = vpack.c.b16 %v528, %v524
  %v641 = vpack.c.b16 %v533, %v529
  %v642 = vpack.c.b16 %v534, %v530
  %v643 = vpack.c.b16 %v535, %v531
  %v644 = vpack.c.b16 %v536, %v532
  %v645 = vpack.c.b16 %v541, %v537
  %v646 = vpack.c.b16 %v542, %v538
  %v647 = vpack.c.b16 %v543, %v539
  %v648 = vpack.c.b16 %v544, %v540
  %v649 = vpack.c.b16 %v549, %v545
  %v650 = vpack.c.b16 %v550, %v546
  %v651 = vpack.c.b16 %v551, %v547
  %v652 = vpack.c.b16 %v552, %v548
  %v653 = vpack.c.b16 %v557, %v553
  %v654 = vpack.c.b16 %v558, %v554
  %v655 = vpack.c.b16 %v559, %v555
  %v656 = vpack.c.b16 %v560, %v556
  %753 = vmatprep.subr.bf16.mxu0 %v562
  %754 = vmatpush1.bf16.msra.mxu0 %v561
  %755 = vmatprep.subr.bf16.mxu0 %v566
  %756 = vmatpush1.bf16.msra.mxu0 %v565
  %757 = vmatprep.subr.bf16.mxu0 %v570
  %758 = vmatpush1.bf16.msra.mxu0 %v569
  %759 = vmatprep.subr.bf16.mxu0 %v574
  %760 = vmatpush1.bf16.msra.mxu0 %v573
  %761 = vmatprep.subr.bf16.mxu0 %v578
  %762 = vmatpush1.bf16.msra.mxu0 %v577
  %763 = vmatprep.subr.bf16.mxu0 %v582
  %764 = vmatpush1.bf16.msra.mxu0 %v581
  %765 = vmatprep.subr.bf16.mxu0 %v586
  %766 = vmatpush1.bf16.msra.mxu0 %v585
  %767 = vmatprep.subr.bf16.mxu0 %v590
  %768 = vmatpush1.bf16.msra.mxu0 %v589
  %769 = vmatprep.subr.bf16.mxu0 %v594
  %770 = vmatpush1.bf16.msra.mxu0 %v593
  %771 = vmatprep.subr.bf16.mxu0 %v598
  %772 = vmatpush1.bf16.msra.mxu0 %v597
  %773 = vmatprep.subr.bf16.mxu0 %v602
  %774 = vmatpush1.bf16.msra.mxu0 %v601
  %775 = vmatprep.subr.bf16.mxu0 %v606
  %776 = vmatpush1.bf16.msra.mxu0 %v605
  %777 = vmatprep.subr.bf16.mxu0 %v610
  %778 = vmatpush1.bf16.msra.mxu0 %v609
  %779 = vmatprep.subr.bf16.mxu0 %v614
  %780 = vmatpush1.bf16.msra.mxu0 %v613
  %781 = vmatprep.subr.bf16.mxu0 %v618
  %782 = vmatpush1.bf16.msra.mxu0 %v617
  %783 = vmatprep.subr.bf16.mxu0 %v622
  %784 = vmatpush1.bf16.msra.mxu0 %v621
  %785 = vmatprep.mubr.bf16.mxu0 %v226
  %786 = vmatmul.mubr.bf16.gmra.mrb[0].mxu0 %v225
  %v787 = vpop.f32.mrb[0].mxu0
  %v788 = vadd.f32 0.0, %v787
  %v789 = vpop.f32.mrb[0].mxu0
  %v790 = vadd.f32 0.0, %v789
  %v791 = vpop.f32.mrb[0].mxu0
  %v792 = vadd.f32 0.0, %v791
  %v793 = vpop.f32.mrb[0].mxu0
  %v794 = vadd.f32 0.0, %v793
  %795 = vmatprep.mubr.bf16.mxu0 %v229
  %796 = vmatmul.mubr.bf16.gmra.mrb[0].mxu0 %v228
  %v797 = vpop.f32.mrb[0].mxu0
  %v798 = vadd.f32 0.0, %v797
  %v799 = vpop.f32.mrb[0].mxu0
  %v800 = vadd.f32 0.0, %v799
  %v801 = vpop.f32.mrb[0].mxu0
  %v802 = vadd.f32 0.0, %v801
  %v803 = vpop.f32.mrb[0].mxu0
  %v804 = vadd.f32 0.0, %v803
  %805 = vmatprep.mubr.bf16.mxu0 %v232
  %806 = vmatmul.mubr.bf16.gmra.mrb[0].mxu0 %v231
  %v807 = vpop.f32.mrb[0].mxu0
  %v808 = vadd.f32 0.0, %v807
  %v809 = vpop.f32.mrb[0].mxu0
  %v810 = vadd.f32 0.0, %v809
  %v811 = vpop.f32.mrb[0].mxu0
  %v812 = vadd.f32 0.0, %v811
  %v813 = vpop.f32.mrb[0].mxu0
  %v814 = vadd.f32 0.0, %v813
  %815 = vmatprep.mubr.bf16.mxu0 %v235
  %816 = vmatmul.mubr.bf16.gmra.mrb[0].mxu0 %v234
  %v817 = vpop.f32.mrb[0].mxu0
  %v818 = vadd.f32 0.0, %v817
  %v819 = vpop.f32.mrb[0].mxu0
  %v820 = vadd.f32 0.0, %v819
  %v821 = vpop.f32.mrb[0].mxu0
  %v822 = vadd.f32 0.0, %v821
  %v823 = vpop.f32.mrb[0].mxu0
  %v824 = vadd.f32 0.0, %v823
  %825 = vmatprep.mubr.bf16.mxu0 %v238
  %826 = vmatmul.mubr.bf16.gmra.mrb[0].mxu0 %v237
  %v827 = vpop.f32.mrb[0].mxu0
  %v828 = vadd.f32 0.0, %v827
  %v829 = vpop.f32.mrb[0].mxu0
  %v830 = vadd.f32 0.0, %v829
  %v831 = vpop.f32.mrb[0].mxu0
  %v832 = vadd.f32 0.0, %v831
  %v833 = vpop.f32.mrb[0].mxu0
  %v834 = vadd.f32 0.0, %v833
  %835 = vmatprep.mubr.bf16.mxu0 %v241
  %836 = vmatmul.mubr.bf16.gmra.mrb[0].mxu0 %v240
  %v837 = vpop.f32.mrb[0].mxu0
  %v838 = vadd.f32 0.0, %v837
  %v839 = vpop.f32.mrb[0].mxu0
  %v840 = vadd.f32 0.0, %v839
  %v841 = vpop.f32.mrb[0].mxu0
  %v842 = vadd.f32 0.0, %v841
  %v843 = vpop.f32.mrb[0].mxu0
  %v844 = vadd.f32 0.0, %v843
  %845 = vmatprep.mubr.bf16.mxu0 %v244
  %846 = vmatmul.mubr.bf16.gmra.mrb[0].mxu0 %v243
  %v847 = vpop.f32.mrb[0].mxu0
  %v848 = vadd.f32 0.0, %v847
  %v849 = vpop.f32.mrb[0].mxu0
  %v850 = vadd.f32 0.0, %v849
  %v851 = vpop.f32.mrb[0].mxu0
  %v852 = vadd.f32 0.0, %v851
  %v853 = vpop.f32.mrb[0].mxu0
  %v854 = vadd.f32 0.0, %v853
  %855 = vmatprep.mubr.bf16.mxu0 %v247
  %856 = vmatmul.mubr.bf16.gmra.mrb[0].mxu0 %v246
  %v857 = vpop.f32.mrb[0].mxu0
  %v858 = vadd.f32 0.0, %v857
  %v859 = vpop.f32.mrb[0].mxu0
  %v860 = vadd.f32 0.0, %v859
  %v861 = vpop.f32.mrb[0].mxu0
  %v862 = vadd.f32 0.0, %v861
  %v863 = vpop.f32.mrb[0].mxu0
  %v864 = vadd.f32 0.0, %v863
  %865 = vdwg.mxu0
  %866 = vmatprep.subr.bf16.mxu0 %v626
  %867 = vmatpush1.bf16.msra.mxu0 %v625
  %868 = vmatprep.subr.bf16.mxu0 %v630
  %869 = vmatpush1.bf16.msra.mxu0 %v629
  %870 = vmatprep.subr.bf16.mxu0 %v634
  %871 = vmatpush1.bf16.msra.mxu0 %v633
  %872 = vmatprep.subr.bf16.mxu0 %v638
  %873 = vmatpush1.bf16.msra.mxu0 %v637
  %874 = vmatprep.subr.bf16.mxu0 %v642
  %875 = vmatpush1.bf16.msra.mxu0 %v641
  %876 = vmatprep.subr.bf16.mxu0 %v646
  %877 = vmatpush1.bf16.msra.mxu0 %v645
  %878 = vmatprep.subr.bf16.mxu0 %v650
  %879 = vmatpush1.bf16.msra.mxu0 %v649
  %880 = vmatprep.subr.bf16.mxu0 %v654
  %881 = vmatpush1.bf16.msra.mxu0 %v653
  %882 = vmatprep.subr.bf16.mxu0 0
  %883 = vmatpush1.bf16.msra.mxu0 0
  %884 = vmatprep.subr.bf16.mxu0 0
  %885 = vmatpush1.bf16.msra.mxu0 0
  %886 = vmatprep.subr.bf16.mxu0 0
  %887 = vmatpush1.bf16.msra.mxu0 0
  %888 = vmatprep.subr.bf16.mxu0 0
  %889 = vmatpush1.bf16.msra.mxu0 0
  %890 = vmatprep.subr.bf16.mxu0 0
  %891 = vmatpush1.bf16.msra.mxu0 0
  %892 = vmatprep.subr.bf16.mxu0 0
  %893 = vmatpush1.bf16.msra.mxu0 0
  %894 = vmatprep.subr.bf16.mxu0 0
  %895 = vmatpush1.bf16.msra.mxu0 0
  %896 = vmatprep.subr.bf16.mxu0 0
  %897 = vmatpush1.bf16.msra.mxu0 0
  %898 = vmatprep.mubr.bf16.mxu0 0
  %899 = vmatmul.mubr.bf16.gmra.mrb[0].mxu0 %v227
  %v900 = vpop.f32.mrb[0].mxu0
  %v901 = vadd.f32 %v788, %v900
  %v902 = vpop.f32.mrb[0].mxu0
  %v903 = vadd.f32 %v790, %v902
  %v904 = vpop.f32.mrb[0].mxu0
  %v905 = vadd.f32 %v792, %v904
  %v906 = vpop.f32.mrb[0].mxu0
  %v907 = vadd.f32 %v794, %v906
  %908 = vmatprep.mubr.bf16.mxu0 0
  %909 = vmatmul.mubr.bf16.gmra.mrb[0].mxu0 %v230
  %v910 = vpop.f32.mrb[0].mxu0
  %v911 = vadd.f32 %v798, %v910
  %v912 = vpop.f32.mrb[0].mxu0
  %v913 = vadd.f32 %v800, %v912
  %v914 = vpop.f32.mrb[0].mxu0
  %v915 = vadd.f32 %v802, %v914
  %v916 = vpop.f32.mrb[0].mxu0
  %v917 = vadd.f32 %v804, %v916
  %918 = vmatprep.mubr.bf16.mxu0 0
  %919 = vmatmul.mubr.bf16.gmra.mrb[0].mxu0 %v233
  %v920 = vpop.f32.mrb[0].mxu0
  %v921 = vadd.f32 %v808, %v920
  %v922 = vpop.f32.mrb[0].mxu0
  %v923 = vadd.f32 %v810, %v922
  %v924 = vpop.f32.mrb[0].mxu0
  %v925 = vadd.f32 %v812, %v924
  %v926 = vpop.f32.mrb[0].mxu0
  %v927 = vadd.f32 %v814, %v926
  %928 = vmatprep.mubr.bf16.mxu0 0
  %929 = vmatmul.mubr.bf16.gmra.mrb[0].mxu0 %v236
  %v930 = vpop.f32.mrb[0].mxu0
  %v931 = vadd.f32 %v818, %v930
  %v932 = vpop.f32.mrb[0].mxu0
  %v933 = vadd.f32 %v820, %v932
  %v934 = vpop.f32.mrb[0].mxu0
  %v935 = vadd.f32 %v822, %v934
  %v936 = vpop.f32.mrb[0].mxu0
  %v937 = vadd.f32 %v824, %v936
  %938 = vmatprep.mubr.bf16.mxu0 0
  %939 = vmatmul.mubr.bf16.gmra.mrb[0].mxu0 %v239
  %v940 = vpop.f32.mrb[0].mxu0
  %v941 = vadd.f32 %v828, %v940
  %v942 = vpop.f32.mrb[0].mxu0
  %v943 = vadd.f32 %v830, %v942
  %v944 = vpop.f32.mrb[0].mxu0
  %v945 = vadd.f32 %v832, %v944
  %v946 = vpop.f32.mrb[0].mxu0
  %v947 = vadd.f32 %v834, %v946
  %948 = vmatprep.mubr.bf16.mxu0 0
  %949 = vmatmul.mubr.bf16.gmra.mrb[0].mxu0 %v242
  %v950 = vpop.f32.mrb[0].mxu0
  %v951 = vadd.f32 %v838, %v950
  %v952 = vpop.f32.mrb[0].mxu0
  %v953 = vadd.f32 %v840, %v952
  %v954 = vpop.f32.mrb[0].mxu0
  %v955 = vadd.f32 %v842, %v954
  %v956 = vpop.f32.mrb[0].mxu0
  %v957 = vadd.f32 %v844, %v956
  %958 = vmatprep.mubr.bf16.mxu0 0
  %959 = vmatmul.mubr.bf16.gmra.mrb[0].mxu0 %v245
  %v960 = vpop.f32.mrb[0].mxu0
  %v961 = vadd.f32 %v848, %v960
  %v962 = vpop.f32.mrb[0].mxu0
  %v963 = vadd.f32 %v850, %v962
  %v964 = vpop.f32.mrb[0].mxu0
  %v965 = vadd.f32 %v852, %v964
  %v966 = vpop.f32.mrb[0].mxu0
  %v967 = vadd.f32 %v854, %v966
  %968 = vmatprep.mubr.bf16.mxu0 0
  %969 = vmatmul.mubr.bf16.gmra.mrb[0].mxu0 %v248
  %v970 = vpop.f32.mrb[0].mxu0
  %v971 = vadd.f32 %v858, %v970
  %v972 = vpop.f32.mrb[0].mxu0
  %v973 = vadd.f32 %v860, %v972
  %v974 = vpop.f32.mrb[0].mxu0
  %v975 = vadd.f32 %v862, %v974
  %v976 = vpop.f32.mrb[0].mxu0
  %v977 = vadd.f32 %v864, %v976
  %978 = vdwg.mxu0
  %979 = vmatprep.subr.bf16.mxu0 %v564
  %980 = vmatpush1.bf16.msra.mxu0 %v563
  %981 = vmatprep.subr.bf16.mxu0 %v568
  %982 = vmatpush1.bf16.msra.mxu0 %v567
  %983 = vmatprep.subr.bf16.mxu0 %v572
  %984 = vmatpush1.bf16.msra.mxu0 %v571
  %985 = vmatprep.subr.bf16.mxu0 %v576
  %986 = vmatpush1.bf16.msra.mxu0 %v575
  %987 = vmatprep.subr.bf16.mxu0 %v580
  %988 = vmatpush1.bf16.msra.mxu0 %v579
  %989 = vmatprep.subr.bf16.mxu0 %v584
  %990 = vmatpush1.bf16.msra.mxu0 %v583
  %991 = vmatprep.subr.bf16.mxu0 %v588
  %992 = vmatpush1.bf16.msra.mxu0 %v587
  %993 = vmatprep.subr.bf16.mxu0 %v592
  %994 = vmatpush1.bf16.msra.mxu0 %v591
  %995 = vmatprep.subr.bf16.mxu0 %v596
  %996 = vmatpush1.bf16.msra.mxu0 %v595
  %997 = vmatprep.subr.bf16.mxu0 %v600
  %998 = vmatpush1.bf16.msra.mxu0 %v599
  %999 = vmatprep.subr.bf16.mxu0 %v604
  %1000 = vmatpush1.bf16.msra.mxu0 %v603
  %1001 = vmatprep.subr.bf16.mxu0 %v608
  %1002 = vmatpush1.bf16.msra.mxu0 %v607
  %1003 = vmatprep.subr.bf16.mxu0 %v612
  %1004 = vmatpush1.bf16.msra.mxu0 %v611
  %1005 = vmatprep.subr.bf16.mxu0 %v616
  %1006 = vmatpush1.bf16.msra.mxu0 %v615
  %1007 = vmatprep.subr.bf16.mxu0 %v620
  %1008 = vmatpush1.bf16.msra.mxu0 %v619
  %1009 = vmatprep.subr.bf16.mxu0 %v624
  %1010 = vmatpush1.bf16.msra.mxu0 %v623
  %1011 = vmatprep.mubr.bf16.mxu0 %v226
  %1012 = vmatmul.mubr.bf16.gmra.mrb[0].mxu0 %v225
  %v1013 = vpop.f32.mrb[0].mxu0
  %v1014 = vadd.f32 0.0, %v1013
  %v1015 = vpop.f32.mrb[0].mxu0
  %v1016 = vadd.f32 0.0, %v1015
  %v1017 = vpop.f32.mrb[0].mxu0
  %v1018 = vadd.f32 0.0, %v1017
  %v1019 = vpop.f32.mrb[0].mxu0
  %v1020 = vadd.f32 0.0, %v1019
  %1021 = vmatprep.mubr.bf16.mxu0 %v229
  %1022 = vmatmul.mubr.bf16.gmra.mrb[0].mxu0 %v228
  %v1023 = vpop.f32.mrb[0].mxu0
  %v1024 = vadd.f32 0.0, %v1023
  %v1025 = vpop.f32.mrb[0].mxu0
  %v1026 = vadd.f32 0.0, %v1025
  %v1027 = vpop.f32.mrb[0].mxu0
  %v1028 = vadd.f32 0.0, %v1027
  %v1029 = vpop.f32.mrb[0].mxu0
  %v1030 = vadd.f32 0.0, %v1029
  %1031 = vmatprep.mubr.bf16.mxu0 %v232
  %1032 = vmatmul.mubr.bf16.gmra.mrb[0].mxu0 %v231
  %v1033 = vpop.f32.mrb[0].mxu0
  %v1034 = vadd.f32 0.0, %v1033
  %v1035 = vpop.f32.mrb[0].mxu0
  %v1036 = vadd.f32 0.0, %v1035
  %v1037 = vpop.f32.mrb[0].mxu0
  %v1038 = vadd.f32 0.0, %v1037
  %v1039 = vpop.f32.mrb[0].mxu0
  %v1040 = vadd.f32 0.0, %v1039
  %1041 = vmatprep.mubr.bf16.mxu0 %v235
  %1042 = vmatmul.mubr.bf16.gmra.mrb[0].mxu0 %v234
  %v1043 = vpop.f32.mrb[0].mxu0
  %v1044 = vadd.f32 0.0, %v1043
  %v1045 = vpop.f32.mrb[0].mxu0
  %v1046 = vadd.f32 0.0, %v1045
  %v1047 = vpop.f32.mrb[0].mxu0
  %v1048 = vadd.f32 0.0, %v1047
  %v1049 = vpop.f32.mrb[0].mxu0
  %v1050 = vadd.f32 0.0, %v1049
  %1051 = vmatprep.mubr.bf16.mxu0 %v238
  %1052 = vmatmul.mubr.bf16.gmra.mrb[0].mxu0 %v237
  %v1053 = vpop.f32.mrb[0].mxu0
  %v1054 = vadd.f32 0.0, %v1053
  %v1055 = vpop.f32.mrb[0].mxu0
  %v1056 = vadd.f32 0.0, %v1055
  %v1057 = vpop.f32.mrb[0].mxu0
  %v1058 = vadd.f32 0.0, %v1057
  %v1059 = vpop.f32.mrb[0].mxu0
  %v1060 = vadd.f32 0.0, %v1059
  %1061 = vmatprep.mubr.bf16.mxu0 %v241
  %1062 = vmatmul.mubr.bf16.gmra.mrb[0].mxu0 %v240
  %v1063 = vpop.f32.mrb[0].mxu0
  %v1064 = vadd.f32 0.0, %v1063
  %v1065 = vpop.f32.mrb[0].mxu0
  %v1066 = vadd.f32 0.0, %v1065
  %v1067 = vpop.f32.mrb[0].mxu0
  %v1068 = vadd.f32 0.0, %v1067
  %v1069 = vpop.f32.mrb[0].mxu0
  %v1070 = vadd.f32 0.0, %v1069
  %1071 = vmatprep.mubr.bf16.mxu0 %v244
  %1072 = vmatmul.mubr.bf16.gmra.mrb[0].mxu0 %v243
  %v1073 = vpop.f32.mrb[0].mxu0
  %v1074 = vadd.f32 0.0, %v1073
  %v1075 = vpop.f32.mrb[0].mxu0
  %v1076 = vadd.f32 0.0, %v1075
  %v1077 = vpop.f32.mrb[0].mxu0
  %v1078 = vadd.f32 0.0, %v1077
  %v1079 = vpop.f32.mrb[0].mxu0
  %v1080 = vadd.f32 0.0, %v1079
  %1081 = vmatprep.mubr.bf16.mxu0 %v247
  %1082 = vmatmul.mubr.bf16.gmra.mrb[0].mxu0 %v246
  %v1083 = vpop.f32.mrb[0].mxu0
  %v1084 = vadd.f32 0.0, %v1083
  %v1085 = vpop.f32.mrb[0].mxu0
  %v1086 = vadd.f32 0.0, %v1085
  %v1087 = vpop.f32.mrb[0].mxu0
  %v1088 = vadd.f32 0.0, %v1087
  %v1089 = vpop.f32.mrb[0].mxu0
  %v1090 = vadd.f32 0.0, %v1089
  %1091 = vdwg.mxu0
  %1092 = vmatprep.subr.bf16.mxu0 %v628
  %1093 = vmatpush1.bf16.msra.mxu0 %v627
  %1094 = vmatprep.subr.bf16.mxu0 %v632
  %1095 = vmatpush1.bf16.msra.mxu0 %v631
  %1096 = vmatprep.subr.bf16.mxu0 %v636
  %1097 = vmatpush1.bf16.msra.mxu0 %v635
  %1098 = vmatprep.subr.bf16.mxu0 %v640
  %1099 = vmatpush1.bf16.msra.mxu0 %v639
  %1100 = vmatprep.subr.bf16.mxu0 %v644
  %1101 = vmatpush1.bf16.msra.mxu0 %v643
  %1102 = vmatprep.subr.bf16.mxu0 %v648
  %1103 = vmatpush1.bf16.msra.mxu0 %v647
  %1104 = vmatprep.subr.bf16.mxu0 %v652
  %1105 = vmatpush1.bf16.msra.mxu0 %v651
  %1106 = vmatprep.subr.bf16.mxu0 %v656
  %1107 = vmatpush1.bf16.msra.mxu0 %v655
  %1108 = vmatprep.subr.bf16.mxu0 0
  %1109 = vmatpush1.bf16.msra.mxu0 0
  %1110 = vmatprep.subr.bf16.mxu0 0
  %1111 = vmatpush1.bf16.msra.mxu0 0
  %1112 = vmatprep.subr.bf16.mxu0 0
  %1113 = vmatpush1.bf16.msra.mxu0 0
  %1114 = vmatprep.subr.bf16.mxu0 0
  %1115 = vmatpush1.bf16.msra.mxu0 0
  %1116 = vmatprep.subr.bf16.mxu0 0
  %1117 = vmatpush1.bf16.msra.mxu0 0
  %1118 = vmatprep.subr.bf16.mxu0 0
  %1119 = vmatpush1.bf16.msra.mxu0 0
  %1120 = vmatprep.subr.bf16.mxu0 0
  %1121 = vmatpush1.bf16.msra.mxu0 0
  %1122 = vmatprep.subr.bf16.mxu0 0
  %1123 = vmatpush1.bf16.msra.mxu0 0
  %1124 = vmatprep.mubr.bf16.mxu0 0
  %1125 = vmatmul.mubr.bf16.gmra.mrb[0].mxu0 %v227
  %v1126 = vpop.f32.mrb[0].mxu0
  %v1127 = vadd.f32 %v1014, %v1126
  %v1128 = vpop.f32.mrb[0].mxu0
  %v1129 = vadd.f32 %v1016, %v1128
  %v1130 = vpop.f32.mrb[0].mxu0
  %v1131 = vadd.f32 %v1018, %v1130
  %v1132 = vpop.f32.mrb[0].mxu0
  %v1133 = vadd.f32 %v1020, %v1132
  %1134 = vmatprep.mubr.bf16.mxu0 0
  %1135 = vmatmul.mubr.bf16.gmra.mrb[0].mxu0 %v230
  %v1136 = vpop.f32.mrb[0].mxu0
  %v1137 = vadd.f32 %v1024, %v1136
  %v1138 = vpop.f32.mrb[0].mxu0
  %v1139 = vadd.f32 %v1026, %v1138
  %v1140 = vpop.f32.mrb[0].mxu0
  %v1141 = vadd.f32 %v1028, %v1140
  %v1142 = vpop.f32.mrb[0].mxu0
  %v1143 = vadd.f32 %v1030, %v1142
  %1144 = vmatprep.mubr.bf16.mxu0 0
  %1145 = vmatmul.mubr.bf16.gmra.mrb[0].mxu0 %v233
  %v1146 = vpop.f32.mrb[0].mxu0
  %v1147 = vadd.f32 %v1034, %v1146
  %v1148 = vpop.f32.mrb[0].mxu0
  %v1149 = vadd.f32 %v1036, %v1148
  %v1150 = vpop.f32.mrb[0].mxu0
  %v1151 = vadd.f32 %v1038, %v1150
  %v1152 = vpop.f32.mrb[0].mxu0
  %v1153 = vadd.f32 %v1040, %v1152
  %1154 = vmatprep.mubr.bf16.mxu0 0
  %1155 = vmatmul.mubr.bf16.gmra.mrb[0].mxu0 %v236
  %v1156 = vpop.f32.mrb[0].mxu0
  %v1157 = vadd.f32 %v1044, %v1156
  %v1158 = vpop.f32.mrb[0].mxu0
  %v1159 = vadd.f32 %v1046, %v1158
  %v1160 = vpop.f32.mrb[0].mxu0
  %v1161 = vadd.f32 %v1048, %v1160
  %v1162 = vpop.f32.mrb[0].mxu0
  %v1163 = vadd.f32 %v1050, %v1162
  %1164 = vmatprep.mubr.bf16.mxu0 0
  %1165 = vmatmul.mubr.bf16.gmra.mrb[0].mxu0 %v239
  %v1166 = vpop.f32.mrb[0].mxu0
  %v1167 = vadd.f32 %v1054, %v1166
  %v1168 = vpop.f32.mrb[0].mxu0
  %v1169 = vadd.f32 %v1056, %v1168
  %v1170 = vpop.f32.mrb[0].mxu0
  %v1171 = vadd.f32 %v1058, %v1170
  %v1172 = vpop.f32.mrb[0].mxu0
  %v1173 = vadd.f32 %v1060, %v1172
  %1174 = vmatprep.mubr.bf16.mxu0 0
  %1175 = vmatmul.mubr.bf16.gmra.mrb[0].mxu0 %v242
  %v1176 = vpop.f32.mrb[0].mxu0
  %v1177 = vadd.f32 %v1064, %v1176
  %v1178 = vpop.f32.mrb[0].mxu0
  %v1179 = vadd.f32 %v1066, %v1178
  %v1180 = vpop.f32.mrb[0].mxu0
  %v1181 = vadd.f32 %v1068, %v1180
  %v1182 = vpop.f32.mrb[0].mxu0
  %v1183 = vadd.f32 %v1070, %v1182
  %1184 = vmatprep.mubr.bf16.mxu0 0
  %1185 = vmatmul.mubr.bf16.gmra.mrb[0].mxu0 %v245
  %v1186 = vpop.f32.mrb[0].mxu0
  %v1187 = vadd.f32 %v1074, %v1186
  %v1188 = vpop.f32.mrb[0].mxu0
  %v1189 = vadd.f32 %v1076, %v1188
  %v1190 = vpop.f32.mrb[0].mxu0
  %v1191 = vadd.f32 %v1078, %v1190
  %v1192 = vpop.f32.mrb[0].mxu0
  %v1193 = vadd.f32 %v1080, %v1192
  %1194 = vmatprep.mubr.bf16.mxu0 0
  %1195 = vmatmul.mubr.bf16.gmra.mrb[0].mxu0 %v248
  %v1196 = vpop.f32.mrb[0].mxu0
  %v1197 = vadd.f32 %v1084, %v1196
  %v1198 = vpop.f32.mrb[0].mxu0
  %v1199 = vadd.f32 %v1086, %v1198
  %v1200 = vpop.f32.mrb[0].mxu0
  %v1201 = vadd.f32 %v1088, %v1200
  %v1202 = vpop.f32.mrb[0].mxu0
  %v1203 = vadd.f32 %v1090, %v1202
  %1204 = vdwg.mxu0
  %v1205 = vxor.u32 %v901, 2147483648
  %v1206 = vxor.u32 %v903, 2147483648
  %v1207 = vxor.u32 %v1127, 2147483648
  %v1208 = vxor.u32 %v1129, 2147483648
  %v1209 = vxor.u32 %v905, 2147483648
  %v1210 = vxor.u32 %v907, 2147483648
  %v1211 = vxor.u32 %v1131, 2147483648
  %v1212 = vxor.u32 %v1133, 2147483648
  %v1213 = vxor.u32 %v911, 2147483648
  %v1214 = vxor.u32 %v913, 2147483648
  %v1215 = vxor.u32 %v1137, 2147483648
  %v1216 = vxor.u32 %v1139, 2147483648
  %v1217 = vxor.u32 %v915, 2147483648
  %v1218 = vxor.u32 %v917, 2147483648
  %v1219 = vxor.u32 %v1141, 2147483648
  %v1220 = vxor.u32 %v1143, 2147483648
  %v1221 = vmul.f32 %v1205, 1.442695
  %v1222 = vpow.pop %v1221
  %v1223 = vmul.f32 %v1206, 1.442695
  %v1224 = vpow.pop %v1223
  %v1225 = vmul.f32 %v1207, 1.442695
  %v1226 = vpow.pop %v1225
  %v1227 = vmul.f32 %v1208, 1.442695
  %v1228 = vpow.pop %v1227
  %v1229 = vmul.f32 %v1209, 1.442695
  %v1230 = vpow.pop %v1229
  %v1231 = vmul.f32 %v1210, 1.442695
  %v1232 = vpow.pop %v1231
  %v1233 = vmul.f32 %v1211, 1.442695
  %v1234 = vpow.pop %v1233
  %v1235 = vmul.f32 %v1212, 1.442695
  %v1236 = vpow.pop %v1235
  %v1237 = vmul.f32 %v1213, 1.442695
  %v1238 = vpow.pop %v1237
  %v1239 = vmul.f32 %v1214, 1.442695
  %v1240 = vpow.pop %v1239
  %v1241 = vmul.f32 %v1215, 1.442695
  %v1242 = vpow.pop %v1241
  %v1243 = vmul.f32 %v1216, 1.442695
  %v1244 = vpow.pop %v1243
  %v1245 = vmul.f32 %v1217, 1.442695
  %v1246 = vpow.pop %v1245
  %v1247 = vmul.f32 %v1218, 1.442695
  %v1248 = vpow.pop %v1247
  %v1249 = vmul.f32 %v1219, 1.442695
  %v1250 = vpow.pop %v1249
  %v1251 = vmul.f32 %v1220, 1.442695
  %v1252 = vpow.pop %v1251
  %v1253 = vadd.f32 %v1222, 1.0
  %v1254 = vadd.f32 %v1224, 1.0
  %v1255 = vadd.f32 %v1226, 1.0
  %v1256 = vadd.f32 %v1228, 1.0
  %v1257 = vadd.f32 %v1230, 1.0
  %v1258 = vadd.f32 %v1232, 1.0
  %v1259 = vadd.f32 %v1234, 1.0
  %v1260 = vadd.f32 %v1236, 1.0
  %v1261 = vadd.f32 %v1238, 1.0
  %v1262 = vadd.f32 %v1240, 1.0
  %v1263 = vadd.f32 %v1242, 1.0
  %v1264 = vadd.f32 %v1244, 1.0
  %v1265 = vadd.f32 %v1246, 1.0
  %v1266 = vadd.f32 %v1248, 1.0
  %v1267 = vadd.f32 %v1250, 1.0
  %v1268 = vadd.f32 %v1252, 1.0
  %v1269 = vrcp.pop %v1253
  %v1270 = vmul.f32 1.0, %v1269
  %v1271 = vrcp.pop %v1254
  %v1272 = vmul.f32 1.0, %v1271
  %v1273 = vrcp.pop %v1255
  %v1274 = vmul.f32 1.0, %v1273
  %v1275 = vrcp.pop %v1256
  %v1276 = vmul.f32 1.0, %v1275
  %v1277 = vrcp.pop %v1257
  %v1278 = vmul.f32 1.0, %v1277
  %v1279 = vrcp.pop %v1258
  %v1280 = vmul.f32 1.0, %v1279
  %v1281 = vrcp.pop %v1259
  %v1282 = vmul.f32 1.0, %v1281
  %v1283 = vrcp.pop %v1260
  %v1284 = vmul.f32 1.0, %v1283
  %v1285 = vrcp.pop %v1261
  %v1286 = vmul.f32 1.0, %v1285
  %v1287 = vrcp.pop %v1262
  %v1288 = vmul.f32 1.0, %v1287
  %v1289 = vrcp.pop %v1263
  %v1290 = vmul.f32 1.0, %v1289
  %v1291 = vrcp.pop %v1264
  %v1292 = vmul.f32 1.0, %v1291
  %v1293 = vrcp.pop %v1265
  %v1294 = vmul.f32 1.0, %v1293
  %v1295 = vrcp.pop %v1266
  %v1296 = vmul.f32 1.0, %v1295
  %v1297 = vrcp.pop %v1267
  %v1298 = vmul.f32 1.0, %v1297
  %v1299 = vrcp.pop %v1268
  %v1300 = vmul.f32 1.0, %v1299
  %v1301 = vtanh.pop %v961
  %v1302 = vtanh.pop %v963
  %v1303 = vtanh.pop %v1187
  %v1304 = vtanh.pop %v1189
  %v1305 = vtanh.pop %v965
  %v1306 = vtanh.pop %v967
  %v1307 = vtanh.pop %v1191
  %v1308 = vtanh.pop %v1193
  %v1309 = vtanh.pop %v971
  %v1310 = vtanh.pop %v973
  %v1311 = vtanh.pop %v1197
  %v1312 = vtanh.pop %v1199
  %v1313 = vtanh.pop %v975
  %v1314 = vtanh.pop %v977
  %v1315 = vtanh.pop %v1201
  %v1316 = vtanh.pop %v1203
  %v1317 = vxor.u32 %v921, 2147483648
  %v1318 = vxor.u32 %v923, 2147483648
  %v1319 = vxor.u32 %v1147, 2147483648
  %v1320 = vxor.u32 %v1149, 2147483648
  %v1321 = vxor.u32 %v925, 2147483648
  %v1322 = vxor.u32 %v927, 2147483648
  %v1323 = vxor.u32 %v1151, 2147483648
  %v1324 = vxor.u32 %v1153, 2147483648
  %v1325 = vxor.u32 %v931, 2147483648
  %v1326 = vxor.u32 %v933, 2147483648
  %v1327 = vxor.u32 %v1157, 2147483648
  %v1328 = vxor.u32 %v1159, 2147483648
  %v1329 = vxor.u32 %v935, 2147483648
  %v1330 = vxor.u32 %v937, 2147483648
  %v1331 = vxor.u32 %v1161, 2147483648
  %v1332 = vxor.u32 %v1163, 2147483648
  %v1333 = vmul.f32 %v1317, 1.442695
  %v1334 = vpow.pop %v1333
  %v1335 = vmul.f32 %v1318, 1.442695
  %v1336 = vpow.pop %v1335
  %v1337 = vmul.f32 %v1319, 1.442695
  %v1338 = vpow.pop %v1337
  %v1339 = vmul.f32 %v1320, 1.442695
  %v1340 = vpow.pop %v1339
  %v1341 = vmul.f32 %v1321, 1.442695
  %v1342 = vpow.pop %v1341
  %v1343 = vmul.f32 %v1322, 1.442695
  %v1344 = vpow.pop %v1343
  %v1345 = vmul.f32 %v1323, 1.442695
  %v1346 = vpow.pop %v1345
  %v1347 = vmul.f32 %v1324, 1.442695
  %v1348 = vpow.pop %v1347
  %v1349 = vmul.f32 %v1325, 1.442695
  %v1350 = vpow.pop %v1349
  %v1351 = vmul.f32 %v1326, 1.442695
  %v1352 = vpow.pop %v1351
  %v1353 = vmul.f32 %v1327, 1.442695
  %v1354 = vpow.pop %v1353
  %v1355 = vmul.f32 %v1328, 1.442695
  %v1356 = vpow.pop %v1355
  %v1357 = vmul.f32 %v1329, 1.442695
  %v1358 = vpow.pop %v1357
  %v1359 = vmul.f32 %v1330, 1.442695
  %v1360 = vpow.pop %v1359
  %v1361 = vmul.f32 %v1331, 1.442695
  %v1362 = vpow.pop %v1361
  %v1363 = vmul.f32 %v1332, 1.442695
  %v1364 = vpow.pop %v1363
  %v1365 = vadd.f32 %v1334, 1.0
  %v1366 = vadd.f32 %v1336, 1.0
  %v1367 = vadd.f32 %v1338, 1.0
  %v1368 = vadd.f32 %v1340, 1.0
  %v1369 = vadd.f32 %v1342, 1.0
  %v1370 = vadd.f32 %v1344, 1.0
  %v1371 = vadd.f32 %v1346, 1.0
  %v1372 = vadd.f32 %v1348, 1.0
  %v1373 = vadd.f32 %v1350, 1.0
  %v1374 = vadd.f32 %v1352, 1.0
  %v1375 = vadd.f32 %v1354, 1.0
  %v1376 = vadd.f32 %v1356, 1.0
  %v1377 = vadd.f32 %v1358, 1.0
  %v1378 = vadd.f32 %v1360, 1.0
  %v1379 = vadd.f32 %v1362, 1.0
  %v1380 = vadd.f32 %v1364, 1.0
  %v1381 = vrcp.pop %v1365
  %v1382 = vmul.f32 1.0, %v1381
  %v1383 = vrcp.pop %v1366
  %v1384 = vmul.f32 1.0, %v1383
  %v1385 = vrcp.pop %v1367
  %v1386 = vmul.f32 1.0, %v1385
  %v1387 = vrcp.pop %v1368
  %v1388 = vmul.f32 1.0, %v1387
  %v1389 = vrcp.pop %v1369
  %v1390 = vmul.f32 1.0, %v1389
  %v1391 = vrcp.pop %v1370
  %v1392 = vmul.f32 1.0, %v1391
  %v1393 = vrcp.pop %v1371
  %v1394 = vmul.f32 1.0, %v1393
  %v1395 = vrcp.pop %v1372
  %v1396 = vmul.f32 1.0, %v1395
  %v1397 = vrcp.pop %v1373
  %v1398 = vmul.f32 1.0, %v1397
  %v1399 = vrcp.pop %v1374
  %v1400 = vmul.f32 1.0, %v1399
  %v1401 = vrcp.pop %v1375
  %v1402 = vmul.f32 1.0, %v1401
  %v1403 = vrcp.pop %v1376
  %v1404 = vmul.f32 1.0, %v1403
  %v1405 = vrcp.pop %v1377
  %v1406 = vmul.f32 1.0, %v1405
  %v1407 = vrcp.pop %v1378
  %v1408 = vmul.f32 1.0, %v1407
  %v1409 = vrcp.pop %v1379
  %v1410 = vmul.f32 1.0, %v1409
  %v1411 = vrcp.pop %v1380
  %v1412 = vmul.f32 1.0, %v1411
  %v1413 = vld [vmem:[%s2] sm:$0xff]
  %v1414 = vld [vmem:[%s2 + $0x8] sm:$0xff]
  %v1415 = vld [vmem:[%s2 + $0x10] sm:$0xff]
  %v1416 = vld [vmem:[%s2 + $0x18] sm:$0xff]
  %v1417 = vld [vmem:[%s2 + $0x20] sm:$0xff]
  %v1418 = vld [vmem:[%s2 + $0x28] sm:$0xff]
  %v1419 = vld [vmem:[%s2 + $0x30] sm:$0xff]
  %v1420 = vld [vmem:[%s2 + $0x38] sm:$0xff]
  %v1421 = vld [vmem:[%s2 + $0x40] sm:$0xff]
  %v1422 = vld [vmem:[%s2 + $0x48] sm:$0xff]
  %v1423 = vld [vmem:[%s2 + $0x50] sm:$0xff]
  %v1424 = vld [vmem:[%s2 + $0x58] sm:$0xff]
  %v1425 = vld [vmem:[%s2 + $0x60] sm:$0xff]
  %v1426 = vld [vmem:[%s2 + $0x68] sm:$0xff]
  %v1427 = vld [vmem:[%s2 + $0x70] sm:$0xff]
  %v1428 = vld [vmem:[%s2 + $0x78] sm:$0xff]
  %v1429 = vmul.f32 %v1382, %v1413
  %v1430 = vmul.f32 %v1384, %v1414
  %v1431 = vmul.f32 %v1386, %v1415
  %v1432 = vmul.f32 %v1388, %v1416
  %v1433 = vmul.f32 %v1390, %v1417
  %v1434 = vmul.f32 %v1392, %v1418
  %v1435 = vmul.f32 %v1394, %v1419
  %v1436 = vmul.f32 %v1396, %v1420
  %v1437 = vmul.f32 %v1398, %v1421
  %v1438 = vmul.f32 %v1400, %v1422
  %v1439 = vmul.f32 %v1402, %v1423
  %v1440 = vmul.f32 %v1404, %v1424
  %v1441 = vmul.f32 %v1406, %v1425
  %v1442 = vmul.f32 %v1408, %v1426
  %v1443 = vmul.f32 %v1410, %v1427
  %v1444 = vmul.f32 %v1412, %v1428
  %v1445 = vmul.f32 %v1270, %v1301
  %v1446 = vmul.f32 %v1272, %v1302
  %v1447 = vmul.f32 %v1274, %v1303
  %v1448 = vmul.f32 %v1276, %v1304
  %v1449 = vmul.f32 %v1278, %v1305
  %v1450 = vmul.f32 %v1280, %v1306
  %v1451 = vmul.f32 %v1282, %v1307
  %v1452 = vmul.f32 %v1284, %v1308
  %v1453 = vmul.f32 %v1286, %v1309
  %v1454 = vmul.f32 %v1288, %v1310
  %v1455 = vmul.f32 %v1290, %v1311
  %v1456 = vmul.f32 %v1292, %v1312
  %v1457 = vmul.f32 %v1294, %v1313
  %v1458 = vmul.f32 %v1296, %v1314
  %v1459 = vmul.f32 %v1298, %v1315
  %v1460 = vmul.f32 %v1300, %v1316
  %v1461 = vadd.f32 %v1429, %v1445
  %v1462 = vadd.f32 %v1430, %v1446
  %v1463 = vadd.f32 %v1431, %v1447
  %v1464 = vadd.f32 %v1432, %v1448
  %v1465 = vadd.f32 %v1433, %v1449
  %v1466 = vadd.f32 %v1434, %v1450
  %v1467 = vadd.f32 %v1435, %v1451
  %v1468 = vadd.f32 %v1436, %v1452
  %v1469 = vadd.f32 %v1437, %v1453
  %v1470 = vadd.f32 %v1438, %v1454
  %v1471 = vadd.f32 %v1439, %v1455
  %v1472 = vadd.f32 %v1440, %v1456
  %v1473 = vadd.f32 %v1441, %v1457
  %v1474 = vadd.f32 %v1442, %v1458
  %v1475 = vadd.f32 %v1443, %v1459
  %v1476 = vadd.f32 %v1444, %v1460
  %1477 = vst [vmem:[%s4] sm:$0xff] %v1461
  %1478 = vst [vmem:[%s4 + $0x8] sm:$0xff] %v1462
  %1479 = vst [vmem:[%s4 + $0x10] sm:$0xff] %v1463
  %1480 = vst [vmem:[%s4 + $0x18] sm:$0xff] %v1464
  %1481 = vst [vmem:[%s4 + $0x20] sm:$0xff] %v1465
  %1482 = vst [vmem:[%s4 + $0x28] sm:$0xff] %v1466
  %1483 = vst [vmem:[%s4 + $0x30] sm:$0xff] %v1467
  %1484 = vst [vmem:[%s4 + $0x38] sm:$0xff] %v1468
  %1485 = vst [vmem:[%s4 + $0x40] sm:$0xff] %v1469
  %1486 = vst [vmem:[%s4 + $0x48] sm:$0xff] %v1470
  %1487 = vst [vmem:[%s4 + $0x50] sm:$0xff] %v1471
  %1488 = vst [vmem:[%s4 + $0x58] sm:$0xff] %v1472
  %1489 = vst [vmem:[%s4 + $0x60] sm:$0xff] %v1473
  %1490 = vst [vmem:[%s4 + $0x68] sm:$0xff] %v1474
  %1491 = vst [vmem:[%s4 + $0x70] sm:$0xff] %v1475
  %1492 = vst [vmem:[%s4 + $0x78] sm:$0xff] %v1476
  %v1493 = vxor.u32 %v941, 2147483648
  %v1494 = vxor.u32 %v943, 2147483648
  %v1495 = vxor.u32 %v1167, 2147483648
  %v1496 = vxor.u32 %v1169, 2147483648
  %v1497 = vxor.u32 %v945, 2147483648
  %v1498 = vxor.u32 %v947, 2147483648
  %v1499 = vxor.u32 %v1171, 2147483648
  %v1500 = vxor.u32 %v1173, 2147483648
  %v1501 = vxor.u32 %v951, 2147483648
  %v1502 = vxor.u32 %v953, 2147483648
  %v1503 = vxor.u32 %v1177, 2147483648
  %v1504 = vxor.u32 %v1179, 2147483648
  %v1505 = vxor.u32 %v955, 2147483648
  %v1506 = vxor.u32 %v957, 2147483648
  %v1507 = vxor.u32 %v1181, 2147483648
  %v1508 = vxor.u32 %v1183, 2147483648
  %v1509 = vmul.f32 %v1493, 1.442695
  %v1510 = vpow.pop %v1509
  %v1511 = vmul.f32 %v1494, 1.442695
  %v1512 = vpow.pop %v1511
  %v1513 = vmul.f32 %v1495, 1.442695
  %v1514 = vpow.pop %v1513
  %v1515 = vmul.f32 %v1496, 1.442695
  %v1516 = vpow.pop %v1515
  %v1517 = vmul.f32 %v1497, 1.442695
  %v1518 = vpow.pop %v1517
  %v1519 = vmul.f32 %v1498, 1.442695
  %v1520 = vpow.pop %v1519
  %v1521 = vmul.f32 %v1499, 1.442695
  %v1522 = vpow.pop %v1521
  %v1523 = vmul.f32 %v1500, 1.442695
  %v1524 = vpow.pop %v1523
  %v1525 = vmul.f32 %v1501, 1.442695
  %v1526 = vpow.pop %v1525
  %v1527 = vmul.f32 %v1502, 1.442695
  %v1528 = vpow.pop %v1527
  %v1529 = vmul.f32 %v1503, 1.442695
  %v1530 = vpow.pop %v1529
  %v1531 = vmul.f32 %v1504, 1.442695
  %v1532 = vpow.pop %v1531
  %v1533 = vmul.f32 %v1505, 1.442695
  %v1534 = vpow.pop %v1533
  %v1535 = vmul.f32 %v1506, 1.442695
  %v1536 = vpow.pop %v1535
  %v1537 = vmul.f32 %v1507, 1.442695
  %v1538 = vpow.pop %v1537
  %v1539 = vmul.f32 %v1508, 1.442695
  %v1540 = vpow.pop %v1539
  %v1541 = vadd.f32 %v1510, 1.0
  %v1542 = vadd.f32 %v1512, 1.0
  %v1543 = vadd.f32 %v1514, 1.0
  %v1544 = vadd.f32 %v1516, 1.0
  %v1545 = vadd.f32 %v1518, 1.0
  %v1546 = vadd.f32 %v1520, 1.0
  %v1547 = vadd.f32 %v1522, 1.0
  %v1548 = vadd.f32 %v1524, 1.0
  %v1549 = vadd.f32 %v1526, 1.0
  %v1550 = vadd.f32 %v1528, 1.0
  %v1551 = vadd.f32 %v1530, 1.0
  %v1552 = vadd.f32 %v1532, 1.0
  %v1553 = vadd.f32 %v1534, 1.0
  %v1554 = vadd.f32 %v1536, 1.0
  %v1555 = vadd.f32 %v1538, 1.0
  %v1556 = vadd.f32 %v1540, 1.0
  %v1557 = vrcp.pop %v1541
  %v1558 = vmul.f32 1.0, %v1557
  %v1559 = vrcp.pop %v1542
  %v1560 = vmul.f32 1.0, %v1559
  %v1561 = vrcp.pop %v1543
  %v1562 = vmul.f32 1.0, %v1561
  %v1563 = vrcp.pop %v1544
  %v1564 = vmul.f32 1.0, %v1563
  %v1565 = vrcp.pop %v1545
  %v1566 = vmul.f32 1.0, %v1565
  %v1567 = vrcp.pop %v1546
  %v1568 = vmul.f32 1.0, %v1567
  %v1569 = vrcp.pop %v1547
  %v1570 = vmul.f32 1.0, %v1569
  %v1571 = vrcp.pop %v1548
  %v1572 = vmul.f32 1.0, %v1571
  %v1573 = vrcp.pop %v1549
  %v1574 = vmul.f32 1.0, %v1573
  %v1575 = vrcp.pop %v1550
  %v1576 = vmul.f32 1.0, %v1575
  %v1577 = vrcp.pop %v1551
  %v1578 = vmul.f32 1.0, %v1577
  %v1579 = vrcp.pop %v1552
  %v1580 = vmul.f32 1.0, %v1579
  %v1581 = vrcp.pop %v1553
  %v1582 = vmul.f32 1.0, %v1581
  %v1583 = vrcp.pop %v1554
  %v1584 = vmul.f32 1.0, %v1583
  %v1585 = vrcp.pop %v1555
  %v1586 = vmul.f32 1.0, %v1585
  %v1587 = vrcp.pop %v1556
  %v1588 = vmul.f32 1.0, %v1587
  %v1589 = vtanh.pop %v1461
  %v1590 = vtanh.pop %v1462
  %v1591 = vtanh.pop %v1463
  %v1592 = vtanh.pop %v1464
  %v1593 = vtanh.pop %v1465
  %v1594 = vtanh.pop %v1466
  %v1595 = vtanh.pop %v1467
  %v1596 = vtanh.pop %v1468
  %v1597 = vtanh.pop %v1469
  %v1598 = vtanh.pop %v1470
  %v1599 = vtanh.pop %v1471
  %v1600 = vtanh.pop %v1472
  %v1601 = vtanh.pop %v1473
  %v1602 = vtanh.pop %v1474
  %v1603 = vtanh.pop %v1475
  %v1604 = vtanh.pop %v1476
  %v1605 = vmul.f32 %v1558, %v1589
  %v1606 = vmul.f32 %v1560, %v1590
  %v1607 = vmul.f32 %v1562, %v1591
  %v1608 = vmul.f32 %v1564, %v1592
  %v1609 = vmul.f32 %v1566, %v1593
  %v1610 = vmul.f32 %v1568, %v1594
  %v1611 = vmul.f32 %v1570, %v1595
  %v1612 = vmul.f32 %v1572, %v1596
  %v1613 = vmul.f32 %v1574, %v1597
  %v1614 = vmul.f32 %v1576, %v1598
  %v1615 = vmul.f32 %v1578, %v1599
  %v1616 = vmul.f32 %v1580, %v1600
  %v1617 = vmul.f32 %v1582, %v1601
  %v1618 = vmul.f32 %v1584, %v1602
  %v1619 = vmul.f32 %v1586, %v1603
  %v1620 = vmul.f32 %v1588, %v1604
  %1621 = vst [vmem:[%s3] sm:$0xff] %v1605
  %1622 = vst [vmem:[%s3 + $0x8] sm:$0xff] %v1606
  %1623 = vst [vmem:[%s3 + $0x10] sm:$0xff] %v1607
  %1624 = vst [vmem:[%s3 + $0x18] sm:$0xff] %v1608
  %1625 = vst [vmem:[%s3 + $0x20] sm:$0xff] %v1609
  %1626 = vst [vmem:[%s3 + $0x28] sm:$0xff] %v1610
  %1627 = vst [vmem:[%s3 + $0x30] sm:$0xff] %v1611
  %1628 = vst [vmem:[%s3 + $0x38] sm:$0xff] %v1612
  %1629 = vst [vmem:[%s3 + $0x40] sm:$0xff] %v1613
  %1630 = vst [vmem:[%s3 + $0x48] sm:$0xff] %v1614
  %1631 = vst [vmem:[%s3 + $0x50] sm:$0xff] %v1615
  %1632 = vst [vmem:[%s3 + $0x58] sm:$0xff] %v1616
  %1633 = vst [vmem:[%s3 + $0x60] sm:$0xff] %v1617
  %1634 = vst [vmem:[%s3 + $0x68] sm:$0xff] %v1618
  %1635 = vst [vmem:[%s3 + $0x70] sm:$0xff] %v1619
  %1636 = vst [vmem:[%s3 + $0x78] sm:$0xff] %v1620
  // Predicated region
  $region14: #{conv_lstm_cell.1} parent=0 // pred_check
    _
  $region15: #{conv_lstm_cell.1} parent=0 // pred_check_branch
    %1638 = sbr.rel (0) target = $region17
  $region16: #{conv_lstm_cell.1} parent=0 // pred_region
    _
  $region17: #{conv_lstm_cell.1} parent=0 // pred_fallthru
    _
  // Predicated region
  $region18: #{conv_lstm_cell.1} parent=0 // pred_check
    _
  $region19: #{conv_lstm_cell.1} parent=0 // pred_check_branch
    %1640 = sbr.rel (0) target = $region21
  $region20: #{conv_lstm_cell.1} parent=0 // pred_region
    _
  $region21: #{conv_lstm_cell.1} parent=0 // pred_fallthru
    _
  // Predicated region
  $region22: #{conv_lstm_cell.1} parent=0 // pred_check
    _
  $region23: #{conv_lstm_cell.1} parent=0 // pred_check_branch
    %1642 = sbr.rel (0) target = $region25
  $region24: #{conv_lstm_cell.1} parent=0 // pred_region
    _
  $region25: #{conv_lstm_cell.1} parent=0 // pred_fallthru
    _
  // Predicated region
  $region26: #{conv_lstm_cell.1} parent=0 // pred_check
    _
  $region27: #{conv_lstm_cell.1} parent=0 // pred_check_branch
    %1644 = sbr.rel (0) target = $region29
  $region28: #{conv_lstm_cell.1} parent=0 // pred_region
    _
  $region29: #{conv_lstm_cell.1} parent=0 // pred_fallthru
    _

</llo_original>
